<compile_context>
chip_gen: v7x
topology: tpu7x:2x2x1
jax: 0.10.0
libtpu: 0.0.40
codegen_flags: <defaults>
</compile_context>

<pallas_src>
import functools

import jax
import jax.numpy as jnp
import numpy as np
from jax.experimental import pallas as pl
from jax.experimental.pallas import tpu as pltpu


# --------------------------------- helpers -----------------------------------


def _vmem_limit(buffer_bytes, scratch_bytes=0):
    # Double-buffered pipeline tiles + resident scratch + headroom for Mosaic
    # internal scratch; capped at 48 MiB (leaves >= 16 MiB of v7x's 64 MiB/TC).
    want = 2 * buffer_bytes + scratch_bytes + (8 << 20)
    return int(min(max(want, 16 << 20), 48 << 20))


def choose_tiles(m, k_dim, *, tm=256, tk=256):
    """256-tiles fill the 2x256x256 MXU (v6e/v7x) and amortize per-step grid
    overhead; tm is halved while possible so the parallel i-axis keeps >= 2
    tiles and both v7x TensorCores get work (v5e's 128x128 MXU is fine with
    either)."""
    tm = min(tm, m)
    tk = min(tk, k_dim)
    assert m % tm == 0 and k_dim % tk == 0
    while m // tm < 2 and tm > 128 and tm % 2 == 0 and m % (tm // 2) == 0:
        tm //= 2
    return tm, tk


def prepare_block(adj_mask_bool, tm, tk):
    """Per-graph one-time precompute: int8 mask, 1/deg scale, block-CSR tile
    lists (compacted nonzero k-tiles per row-tile) for DMA + MXU skipping."""
    mask_np = np.asarray(adj_mask_bool, dtype=np.int8)
    m, k_dim = mask_np.shape
    assert m % tm == 0 and k_dim % tk == 0
    n_i, n_k = m // tm, k_dim // tk

    deg = mask_np.sum(axis=-1).astype(np.float32)
    inv_deg = (1.0 / np.maximum(deg, 1.0)).astype(np.float32)[:, None]   # (m, 1)

    occ = mask_np.reshape(n_i, tm, n_k, tk).sum(axis=(1, 3)) > 0          # (n_i, n_k)
    nnz = occ.sum(axis=1).astype(np.int32)
    max_nnz = max(1, int(nnz.max()))
    cols = np.zeros((n_i, max_nnz), np.int32)
    for i in range(n_i):
        idx = np.nonzero(occ[i])[0]
        if idx.size:
            cols[i, :idx.size] = idx
            # Pad trailing steps with the last valid block index so Pallas'
            # same-block-index dedup suppresses the redundant DMAs.
            cols[i, idx.size:] = idx[-1]

    return {
        "a": jnp.asarray(mask_np),                 # int8 {0,1}: half bf16's HBM bytes, exact
        "inv_deg": jnp.asarray(inv_deg),           # f32 (m, 1)
        "cols": jnp.asarray(cols.reshape(-1)),     # flattened 1-D (avoids 2-D SMEM padding)
        "nnz": jnp.asarray(nnz),                   # int32 (n_i,)
        "max_nnz": max_nnz,
        "nnz_tiles": int(nnz.sum()),
        "tm": tm,
        "tk": tk,
    }


# ----------------------------- SAGEConv layer kernel --------------------------


def _sage_layer_kernel(cols_ref, nnz_ref, a_ref, hsrc_ref, hdst_ref,
                       ws_ref, wn_ref, b_ref, invd_ref,
                       o_ref, acc_ref, self_ref, *, apply_relu):
    i = pl.program_id(0)
    t = pl.program_id(1)

    @pl.when(t == 0)
    def _():
        acc_ref[...] = jnp.zeros_like(acc_ref)
        # Self-projection hoisted off the final-step critical path: it overlaps
        # the A / h_src DMAs of the remaining t steps.
        self_ref[...] = jnp.dot(hdst_ref[...], ws_ref[...],
                                preferred_element_type=jnp.float32)

    # Block-CSR contraction: t walks the compacted nonzero k-tiles of row-tile i;
    # padded trailing steps (t >= nnz[i]) repeat the previous block index (DMA
    # deduped) and skip the MXU entirely.
    @pl.when(t < nnz_ref[i])
    def _():
        a_tile = a_ref[...].astype(jnp.float32).astype(jnp.bfloat16)  # {0,1} mask
        acc_ref[...] += jnp.dot(a_tile, hsrc_ref[...],
                                preferred_element_type=jnp.float32)

    @pl.when(t == pl.num_programs(1) - 1)
    def _():
        neigh = jnp.dot(acc_ref[...].astype(jnp.bfloat16), wn_ref[...],
                        preferred_element_type=jnp.float32)
        # Exact mean: 1/deg applied once, in f32, to the projected sum
        # (diag(1/deg) commutes with the linear neighbor projection).
        out = self_ref[...] + invd_ref[...] * neigh + b_ref[...]
        if apply_relu:
            out = jnp.maximum(out, 0.0)           # f32 epilogue (safe on v5e too)
        o_ref[...] = out.astype(o_ref.dtype)


def sage_layer(blk, h, lp, *, apply_relu):
    """One SAGEConv('mean') layer:
       relu?( h_dst @ W_self + (diag(1/deg) @ mask @ h_src) @ W_neigh + b )."""
    a, inv_deg = blk["a"], blk["inv_deg"]
    cols, nnz = blk["cols"], blk["nnz"]
    max_nnz, tm, tk = blk["max_nnz"], blk["tm"], blk["tk"]
    m, k_dim = a.shape
    d_in = h.shape[1]
    w_self, w_neigh, bias = lp["w_self"], lp["w_neigh"], lp["bias"]
    d_out = w_self.shape[1]
    n_i = m // tm

    kernel = functools.partial(_sage_layer_kernel, apply_relu=apply_relu)

    nnz_tiles = blk["nnz_tiles"]
    flops = 2 * nnz_tiles * tm * tk * d_in + 4 * m * d_in * d_out
    bytes_accessed = (nnz_tiles * tm * tk                # int8 A tiles actually streamed
                      + nnz_tiles * tk * d_in * 2        # h_src tiles
                      + m * d_in * 2                     # h_dst
                      + 2 * d_in * d_out * 2             # W_self + W_neigh
                      + m * d_out * 2 + m * 4 + d_out * 4)

    tile_bytes = (tm * tk                                # A tile (int8)
                  + tk * d_in * 2 + tm * d_in * 2        # h_src / h_dst (bf16)
                  + 2 * d_in * d_out * 2                 # weights (bf16)
                  + d_out * 4 + tm * 4                   # bias + inv_deg (f32)
                  + tm * d_out * 2)                      # output tile (bf16)
    scratch_bytes = tm * d_in * 4 + tm * d_out * 4

    grid_spec = pltpu.PrefetchScalarGridSpec(
        num_scalar_prefetch=2,
        grid=(n_i, max_nnz),
        in_specs=[
            pl.BlockSpec((tm, tk),
                         lambda i, t, cols, nnz: (i, cols[i * max_nnz + t])),   # A tile
            pl.BlockSpec((tk, d_in),
                         lambda i, t, cols, nnz: (cols[i * max_nnz + t], 0)),   # h_src
            pl.BlockSpec((tm, d_in), lambda i, t, cols, nnz: (i, 0)),           # h_dst
            pl.BlockSpec((d_in, d_out), lambda i, t, cols, nnz: (0, 0)),        # W_self
            pl.BlockSpec((d_in, d_out), lambda i, t, cols, nnz: (0, 0)),        # W_neigh
            pl.BlockSpec((1, d_out), lambda i, t, cols, nnz: (0, 0)),           # bias
            pl.BlockSpec((tm, 1), lambda i, t, cols, nnz: (i, 0)),              # 1/deg
        ],
        out_specs=pl.BlockSpec((tm, d_out), lambda i, t, cols, nnz: (i, 0)),
        scratch_shapes=[pltpu.VMEM((tm, d_in), jnp.float32),    # neighbor-sum acc
                        pltpu.VMEM((tm, d_out), jnp.float32)],  # hoisted self proj
    )
    return pl.pallas_call(
        kernel,
        grid_spec=grid_spec,
        out_shape=jax.ShapeDtypeStruct((m, d_out), jnp.bfloat16),
        compiler_params=pltpu.CompilerParams(
            dimension_semantics=("parallel", "arbitrary"),
            vmem_limit_bytes=_vmem_limit(tile_bytes, scratch_bytes)),
        cost_estimate=pl.CostEstimate(flops=flops, transcendentals=0,
                                      bytes_accessed=bytes_accessed),
    )(cols, nnz, a, h, h, w_self, w_neigh, bias, inv_deg)


# ------------------------------ edge predictor --------------------------------


def _predictor_kernel(hs_ref, hd_ref, w1_ref, b1_ref, w2_ref, b2_ref,
                      w3r_ref, b3_ref, o_ref):
    # bf16 elementwise product (bf16 VPU lanes on v6e/v7x); f32 MXU accumulation.
    x = hs_ref[...] * hd_ref[...]
    x = jnp.dot(x, w1_ref[...], preferred_element_type=jnp.float32) + b1_ref[...]
    x = jnp.maximum(x, 0.0).astype(jnp.bfloat16)
    x = jnp.dot(x, w2_ref[...], preferred_element_type=jnp.float32) + b2_ref[...]
    x = jnp.maximum(x, 0.0)
    # Final (hid -> 1) projection as an XLU lane reduction instead of a width-1
    # MXU matmul; lane-dense 1-D store (avoids masked vst on an (E,1) column).
    score = jnp.sum(x * w3r_ref[...], axis=-1) + b3_ref[0, 0]
    o_ref[...] = score.astype(o_ref.dtype)


def predictor(h_src, h_dst, params, *, te=512):
    """Edge-score MLP on elementwise product of endpoint embeddings (tiled over E)."""
    w1, b1, w2, b2, w3_row, b3 = params
    e, hid = h_src.shape
    te = min(te, e)
    assert e % te == 0  # TODO(synk): pad ragged edge batches to a tile multiple
    n_e = e // te

    flops = 4 * e * hid * hid + 5 * e * hid
    bytes_accessed = 2 * e * hid * 2 + 2 * hid * hid * 2 + (3 * hid + 1) * 4 + e * 4
    tile_bytes = 2 * te * hid * 2 + 2 * hid * hid * 2 + (3 * hid + 1) * 4 + te * 4

    grid_spec = pltpu.PrefetchScalarGridSpec(
        num_scalar_prefetch=0,
        grid=(n_e,),
        in_specs=[
            pl.BlockSpec((te, hid), lambda i: (i, 0)),
            pl.BlockSpec((te, hid), lambda i: (i, 0)),
            pl.BlockSpec(w1.shape, lambda i: (0, 0)),
            pl.BlockSpec(b1.shape, lambda i: (0, 0)),
            pl.BlockSpec(w2.shape, lambda i: (0, 0)),
            pl.BlockSpec(b2.shape, lambda i: (0, 0)),
            pl.BlockSpec(w3_row.shape, lambda i: (0, 0)),
            pl.BlockSpec(b3.shape, lambda i: (0, 0)),
        ],
        out_specs=pl.BlockSpec((te,), lambda i: (i,)),   # lane-dense score slab
    )
    scores = pl.pallas_call(
        _predictor_kernel,
        grid_spec=grid_spec,
        out_shape=jax.ShapeDtypeStruct((e,), jnp.float32),
        compiler_params=pltpu.CompilerParams(
            dimension_semantics=("parallel",),
            vmem_limit_bytes=_vmem_limit(tile_bytes)),
        cost_estimate=pl.CostEstimate(flops=flops, transcendentals=0,
                                      bytes_accessed=bytes_accessed),
    )(h_src, h_dst, w1, b1, w2, b2, w3_row, b3)
    return scores.reshape(e, 1)


# ------------------------------- forward pass ---------------------------------


def graphsage_forward(params, blocks, x, pos_edges, neg_edges):
    """Mirrors GraphSAGE.forward (weighted=False, edge_weight=None)."""
    h = x.astype(jnp.bfloat16)
    n_layers = len(params["layers"])
    for l, (lp, blk) in enumerate(zip(params["layers"], blocks)):
        h = sage_layer(blk, h, lp, apply_relu=(l != n_layers - 1))
    pos_src, pos_dst = pos_edges
    neg_src, neg_dst = neg_edges
    n_pos = pos_src.shape[0]
    # pos+neg batches fused into ONE predictor call.
    # TODO(synk): move this endpoint gather into the predictor kernel
    # (scalar-prefetched indices + in-kernel DMA row gather) to avoid the extra
    # (E, hid) HBM write+read.
    src = jnp.concatenate([pos_src, neg_src])
    dst = jnp.concatenate([pos_dst, neg_dst])
    scores = predictor(h[src], h[dst], params["predictor"])
    return scores[:n_pos], scores[n_pos:]


# ------------------------------ param init ------------------------------------


def init_params(key, in_size, hid_size):
    keys = jax.random.split(key, 16)
    ki = iter(keys)

    def lin(k, fan_in, fan_out):
        scale = 1.0 / jnp.sqrt(jnp.float32(fan_in))
        return jax.random.uniform(k, (fan_in, fan_out), jnp.float32, -scale, scale)

    layers = []
    dims = [(in_size, hid_size), (hid_size, hid_size), (hid_size, hid_size)]
    for di, do in dims:
        layers.append({
            "w_self": lin(next(ki), di, do).astype(jnp.bfloat16),
            "w_neigh": lin(next(ki), di, do).astype(jnp.bfloat16),
            "bias": jnp.zeros((1, do), jnp.float32),
        })

    pred = (
        lin(next(ki), hid_size, hid_size).astype(jnp.bfloat16),
        jnp.zeros((1, hid_size), jnp.float32),
        lin(next(ki), hid_size, hid_size).astype(jnp.bfloat16),
        jnp.zeros((1, hid_size), jnp.float32),
        lin(next(ki), hid_size, 1).T.astype(jnp.float32),   # (1, hid) row for lane reduce
        jnp.zeros((1, 1), jnp.float32),
    )
    return {"layers": layers, "predictor": pred}


def make_adjacency_mask(key, n, p=0.15):
    """Random unweighted graph -> boolean adjacency mask."""
    return jax.random.uniform(key, (n, n)) < p


# --------------------------------- main ----------------------------------------

if __name__ == "__main__":
    # Lane-dense dims (multiples of 128) and tileable node / edge counts.
    IN_SIZE, HID_SIZE = 128, 128
    N_NODES = 256
    N_POS, N_NEG = 128, 128

    key = jax.random.PRNGKey(0)
    k_param, k_x, k_g0, k_g1, k_g2, k_e = jax.random.split(key, 6)

    params = init_params(k_param, IN_SIZE, HID_SIZE)
    x = jax.random.normal(k_x, (N_NODES, IN_SIZE), jnp.float32)

    # Per-graph precompute (once, not per layer call): tiles, int8 mask,
    # 1/deg scale, block-CSR nonzero-tile lists.
    tm, tk = choose_tiles(N_NODES, N_NODES)
    blocks = [prepare_block(make_adjacency_mask(kg, N_NODES), tm, tk)
              for kg in (k_g0, k_g1, k_g2)]

    ke1, ke2, ke3, ke4 = jax.random.split(k_e, 4)
    pos_edges = (jax.random.randint(ke1, (N_POS,), 0, N_NODES),
                 jax.random.randint(ke2, (N_POS,), 0, N_NODES))
    neg_edges = (jax.random.randint(ke3, (N_NEG,), 0, N_NODES),
                 jax.random.randint(ke4, (N_NEG,), 0, N_NODES))

    h_pos, h_neg = graphsage_forward(params, blocks, x, pos_edges, neg_edges)
    jax.block_until_ready((h_pos, h_neg))
    assert h_pos.shape == (N_POS, 1) and h_neg.shape == (N_NEG, 1)
    assert bool(jnp.all(jnp.isfinite(h_pos))) and bool(jnp.all(jnp.isfinite(h_neg)))
    print("KERNEL_OK")
</pallas_src>

<mosaic_0001>
module attributes {stable_mosaic.version = 11 : i64} {
  func.func @_sage_layer_kernel(%arg0: i32, %arg1: i32, %arg2: memref<2xi32, #tpu.memory_space<smem>>, %arg3: memref<2xi32, #tpu.memory_space<smem>>, %arg4: memref<128x256xi8, #tpu.memory_space<vmem>>, %arg5: memref<256x128xbf16, #tpu.memory_space<vmem>>, %arg6: memref<128x128xbf16, #tpu.memory_space<vmem>>, %arg7: memref<128x128xbf16, #tpu.memory_space<vmem>>, %arg8: memref<128x128xbf16, #tpu.memory_space<vmem>>, %arg9: memref<1x128xf32, #tpu.memory_space<vmem>>, %arg10: memref<128x1xf32, #tpu.memory_space<vmem>>, %arg11: memref<128x128xbf16, #tpu.memory_space<vmem>>, %arg12: memref<128x128xf32, #tpu.memory_space<vmem>>, %arg13: memref<128x128xf32, #tpu.memory_space<vmem>>) attributes {dimension_semantics = [#tpu.dimension_semantics<parallel>, #tpu.dimension_semantics<arbitrary>], iteration_bounds = array<i64: 2, 1>, scalar_prefetch = 2 : i64, scratch_operands = 2 : i64, tpu.core_type = #tpu.core_type<tc>, window_params = [{transform_indices = @transform_0, window_bounds = array<i64: 128, 256>}, {transform_indices = @transform_1, window_bounds = array<i64: 256, 128>}, {transform_indices = @transform_2, window_bounds = array<i64: 128, 128>}, {pipeline_mode = #tpu.pipeline_mode<synchronous>, transform_indices = @transform_3, window_bounds = array<i64: 128, 128>}, {pipeline_mode = #tpu.pipeline_mode<synchronous>, transform_indices = @transform_4, window_bounds = array<i64: 128, 128>}, {pipeline_mode = #tpu.pipeline_mode<synchronous>, transform_indices = @transform_5, window_bounds = array<i64: 1, 128>}, {transform_indices = @transform_6, window_bounds = array<i64: 128, 1>}, {transform_indices = @transform_7, window_bounds = array<i64: 128, 128>}]} {
    %c0_i32 = arith.constant 0 : i32
    %0 = arith.cmpi eq, %arg1, %c0_i32 : i32
    %1 = arith.extui %0 : i1 to i32
    %c0_i32_0 = arith.constant 0 : i32
    %2 = arith.cmpi ne, %1, %c0_i32_0 : i32
    scf.if %2 {
      %cst = arith.constant 0.000000e+00 : f32
      %11 = vector.broadcast %cst : f32 to vector<128x128xf32>
      %c0 = arith.constant 0 : index
      %c0_4 = arith.constant 0 : index
      %12 = vector.load %arg12[%c0, %c0_4] : memref<128x128xf32, #tpu.memory_space<vmem>>, vector<128x128xf32>
      tpu.vector_store %arg12[%c0, %c0_4], %11 {strides = array<i32>} : memref<128x128xf32, #tpu.memory_space<vmem>>, vector<128x128xf32>,
      %c0_5 = arith.constant 0 : index
      %c0_6 = arith.constant 0 : index
      %13 = vector.load %arg6[%c0_5, %c0_6] : memref<128x128xbf16, #tpu.memory_space<vmem>>, vector<128x128xbf16>
      %c0_7 = arith.constant 0 : index
      %c0_8 = arith.constant 0 : index
      %14 = vector.load %arg7[%c0_7, %c0_8] : memref<128x128xbf16, #tpu.memory_space<vmem>>, vector<128x128xbf16>
      %cst_9 = arith.constant dense<0.000000e+00> : vector<128x128xf32>
      %15 = tpu.matmul %13, %14, %cst_9 {dimension_numbers = #tpu.dot_dimension_numbers<[1], [0], [0], [1], [0, 0, 1, 1], [], []>} : vector<128x128xbf16>, vector<128x128xbf16>, vector<128x128xf32> -> vector<128x128xf32>
      %c0_10 = arith.constant 0 : index
      %c0_11 = arith.constant 0 : index
      %16 = vector.load %arg13[%c0_10, %c0_11] : memref<128x128xf32, #tpu.memory_space<vmem>>, vector<128x128xf32>
      tpu.vector_store %arg13[%c0_10, %c0_11], %15 {strides = array<i32>} : memref<128x128xf32, #tpu.memory_space<vmem>>, vector<128x128xf32>,
    } else {
    }
    %3 = arith.index_cast %arg0 : i32 to index
    %4 = memref.load %arg3[%3] : memref<2xi32, #tpu.memory_space<smem>>
    %5 = arith.cmpi slt, %arg1, %4 : i32
    %6 = arith.extui %5 : i1 to i32
    %c0_i32_1 = arith.constant 0 : i32
    %7 = arith.cmpi ne, %6, %c0_i32_1 : i32
    scf.if %7 {
      %c0 = arith.constant 0 : index
      %c0_4 = arith.constant 0 : index
      %11 = vector.load %arg4[%c0, %c0_4] : memref<128x256xi8, #tpu.memory_space<vmem>>, vector<128x256xi8>
      %12 = arith.sitofp %11 : vector<128x256xi8> to vector<128x256xf32>
      %13 = arith.truncf %12 : vector<128x256xf32> to vector<128x256xbf16>
      %c0_5 = arith.constant 0 : index
      %c0_6 = arith.constant 0 : index
      %14 = vector.load %arg12[%c0_5, %c0_6] : memref<128x128xf32, #tpu.memory_space<vmem>>, vector<128x128xf32>
      %c0_7 = arith.constant 0 : index
      %c0_8 = arith.constant 0 : index
      %15 = vector.load %arg5[%c0_7, %c0_8] : memref<256x128xbf16, #tpu.memory_space<vmem>>, vector<256x128xbf16>
      %cst = arith.constant dense<0.000000e+00> : vector<128x128xf32>
      %16 = tpu.matmul %13, %15, %cst {dimension_numbers = #tpu.dot_dimension_numbers<[1], [0], [0], [1], [0, 0, 1, 1], [], []>} : vector<128x256xbf16>, vector<256x128xbf16>, vector<128x128xf32> -> vector<128x128xf32>
      %17 = arith.addf %14, %16 : vector<128x128xf32>
      %c0_9 = arith.constant 0 : index
      %c0_10 = arith.constant 0 : index
      %18 = vector.load %arg12[%c0_9, %c0_10] : memref<128x128xf32, #tpu.memory_space<vmem>>, vector<128x128xf32>
      tpu.vector_store %arg12[%c0_9, %c0_10], %17 {strides = array<i32>} : memref<128x128xf32, #tpu.memory_space<vmem>>, vector<128x128xf32>,
    } else {
    }
    %c0_i32_2 = arith.constant 0 : i32
    %8 = arith.cmpi eq, %arg1, %c0_i32_2 : i32
    %9 = arith.extui %8 : i1 to i32
    %c0_i32_3 = arith.constant 0 : i32
    %10 = arith.cmpi ne, %9, %c0_i32_3 : i32
    scf.if %10 {
      %c0 = arith.constant 0 : index
      %c0_4 = arith.constant 0 : index
      %11 = vector.load %arg12[%c0, %c0_4] : memref<128x128xf32, #tpu.memory_space<vmem>>, vector<128x128xf32>
      %12 = arith.truncf %11 : vector<128x128xf32> to vector<128x128xbf16>
      %c0_5 = arith.constant 0 : index
      %c0_6 = arith.constant 0 : index
      %13 = vector.load %arg8[%c0_5, %c0_6] : memref<128x128xbf16, #tpu.memory_space<vmem>>, vector<128x128xbf16>
      %cst = arith.constant dense<0.000000e+00> : vector<128x128xf32>
      %14 = tpu.matmul %12, %13, %cst {dimension_numbers = #tpu.dot_dimension_numbers<[1], [0], [0], [1], [0, 0, 1, 1], [], []>} : vector<128x128xbf16>, vector<128x128xbf16>, vector<128x128xf32> -> vector<128x128xf32>
      %c0_7 = arith.constant 0 : index
      %c0_8 = arith.constant 0 : index
      %15 = vector.load %arg13[%c0_7, %c0_8] : memref<128x128xf32, #tpu.memory_space<vmem>>, vector<128x128xf32>
      %c0_9 = arith.constant 0 : index
      %c0_10 = arith.constant 0 : index
      %16 = vector.load %arg10[%c0_9, %c0_10] : memref<128x1xf32, #tpu.memory_space<vmem>>, vector<128x1xf32>
      %17 = vector.broadcast %16 : vector<128x1xf32> to vector<128x128xf32>
      %18 = arith.mulf %17, %14 : vector<128x128xf32>
      %19 = arith.addf %15, %18 : vector<128x128xf32>
      %c0_11 = arith.constant 0 : index
      %c0_12 = arith.constant 0 : index
      %20 = vector.load %arg9[%c0_11, %c0_12] : memref<1x128xf32, #tpu.memory_space<vmem>>, vector<1x128xf32>
      %21 = vector.broadcast %20 : vector<1x128xf32> to vector<128x128xf32>
      %22 = arith.addf %19, %21 : vector<128x128xf32>
      %cst_13 = arith.constant 0.000000e+00 : f32
      %23 = vector.broadcast %cst_13 : f32 to vector<128x128xf32>
      %24 = arith.maximumf %22, %23 : vector<128x128xf32>
      %25 = arith.truncf %24 : vector<128x128xf32> to vector<128x128xbf16>
      %c0_14 = arith.constant 0 : index
      %c0_15 = arith.constant 0 : index
      %26 = vector.load %arg11[%c0_14, %c0_15] : memref<128x128xbf16, #tpu.memory_space<vmem>>, vector<128x128xbf16>
      tpu.vector_store %arg11[%c0_14, %c0_15], %25 {strides = array<i32>} : memref<128x128xbf16, #tpu.memory_space<vmem>>, vector<128x128xbf16>,
    } else {
    }
    return
  }
  func.func @transform_0(%arg0: i32, %arg1: i32, %arg2: memref<2xi32, #tpu.memory_space<smem>>, %arg3: memref<2xi32, #tpu.memory_space<smem>>) -> (i32, i32) {
    %c1_i32 = arith.constant 1 : i32
    %0 = arith.muli %arg0, %c1_i32 : i32
    %1 = arith.addi %0, %arg1 : i32
    %2 = arith.index_cast %1 : i32 to index
    %3 = memref.load %arg2[%2] : memref<2xi32, #tpu.memory_space<smem>>
    %c0_i32 = arith.constant 0 : i32
    return %arg0, %3 : i32, i32
  }
  func.func @transform_1(%arg0: i32, %arg1: i32, %arg2: memref<2xi32, #tpu.memory_space<smem>>, %arg3: memref<2xi32, #tpu.memory_space<smem>>) -> (i32, i32) {
    %c1_i32 = arith.constant 1 : i32
    %0 = arith.muli %arg0, %c1_i32 : i32
    %1 = arith.addi %0, %arg1 : i32
    %2 = arith.index_cast %1 : i32 to index
    %3 = memref.load %arg2[%2] : memref<2xi32, #tpu.memory_space<smem>>
    %c0_i32 = arith.constant 0 : i32
    %c0_i32_0 = arith.constant 0 : i32
    return %3, %c0_i32 : i32, i32
  }
  func.func @transform_2(%arg0: i32, %arg1: i32, %arg2: memref<2xi32, #tpu.memory_space<smem>>, %arg3: memref<2xi32, #tpu.memory_space<smem>>) -> (i32, i32) {
    %c0_i32 = arith.constant 0 : i32
    %c0_i32_0 = arith.constant 0 : i32
    return %arg0, %c0_i32 : i32, i32
  }
  func.func @transform_3(%arg0: i32, %arg1: i32, %arg2: memref<2xi32, #tpu.memory_space<smem>>, %arg3: memref<2xi32, #tpu.memory_space<smem>>) -> (i32, i32) {
    %c0_i32 = arith.constant 0 : i32
    %c0_i32_0 = arith.constant 0 : i32
    %c0_i32_1 = arith.constant 0 : i32
    return %c0_i32, %c0_i32_0 : i32, i32
  }
  func.func @transform_4(%arg0: i32, %arg1: i32, %arg2: memref<2xi32, #tpu.memory_space<smem>>, %arg3: memref<2xi32, #tpu.memory_space<smem>>) -> (i32, i32) {
    %c0_i32 = arith.constant 0 : i32
    %c0_i32_0 = arith.constant 0 : i32
    %c0_i32_1 = arith.constant 0 : i32
    return %c0_i32, %c0_i32_0 : i32, i32
  }
  func.func @transform_5(%arg0: i32, %arg1: i32, %arg2: memref<2xi32, #tpu.memory_space<smem>>, %arg3: memref<2xi32, #tpu.memory_space<smem>>) -> (i32, i32) {
    %c0_i32 = arith.constant 0 : i32
    %c0_i32_0 = arith.constant 0 : i32
    %c0_i32_1 = arith.constant 0 : i32
    return %c0_i32, %c0_i32_0 : i32, i32
  }
  func.func @transform_6(%arg0: i32, %arg1: i32, %arg2: memref<2xi32, #tpu.memory_space<smem>>, %arg3: memref<2xi32, #tpu.memory_space<smem>>) -> (i32, i32) {
    %c0_i32 = arith.constant 0 : i32
    %c0_i32_0 = arith.constant 0 : i32
    return %arg0, %c0_i32 : i32, i32
  }
  func.func @transform_7(%arg0: i32, %arg1: i32, %arg2: memref<2xi32, #tpu.memory_space<smem>>, %arg3: memref<2xi32, #tpu.memory_space<smem>>) -> (i32, i32) {
    %c0_i32 = arith.constant 0 : i32
    %c0_i32_0 = arith.constant 0 : i32
    return %arg0, %c0_i32 : i32, i32
  }
}

</mosaic_0001>

<llo_original>
// kernel: tpu_custom_call.1
$region0: #{tpu_custom_call.1}
  #allocation0 [shape = 'u32[]', space=smem, size = 0x4, offset = 0x4, fixed_abs, tag = 'smem constant byte address 0x4 - core index']
  #allocation1 [shape = 'u32[144,128]{1,0:T(1,128)}', space=vmem, size = 0x12000, scoped, tag = 'internal scratch']
  #allocation2 [shape = 'f32[128,128]{1,0:T(8,128)}', space=vmem, size = 0x10000, scoped, tag = 'scratch operand']
  #allocation3 [shape = 'f32[128,128]{1,0:T(8,128)}', space=vmem, size = 0x10000, scoped, tag = 'scratch operand']
  #allocation4 [shape = 's32[1]{0}', space=sflag, size = 0x4, scoped, tag = 'scoped memory for tpu_custom_call.1']
  #allocation5 [shape = 'u8[512]{0}', space=smem, size = 0x200, scoped, tag = 'prefetched SMEM operand 0']
  #allocation6 [shape = 'u8[512]{0}', space=smem, size = 0x200, scoped, tag = 'prefetched SMEM operand 1']
  %s0 = inlined_call_operand.vmem [shape: s32[2], index: 0, kind: input, shape index: {}]
  %s1 = inlined_call_operand.vmem [shape: s32[2], index: 1, kind: input, shape index: {}]
  %s2 = inlined_call_operand.vmem [shape: s8[256,256], index: 2, kind: input, shape index: {}]
  %s3 = inlined_call_operand.vmem [shape: bf16[256,128], index: 3, kind: input, shape index: {}]
  %s4 = inlined_call_operand.hbm [shape: bf16[256,128], index: 4, kind: input, shape index: {}]
  %s5 = inlined_call_operand.hbm [shape: bf16[128,128], index: 5, kind: input, shape index: {}]
  %s6 = inlined_call_operand.hbm [shape: bf16[128,128], index: 6, kind: input, shape index: {}]
  %s7 = inlined_call_operand.vmem [shape: f32[1,128], index: 7, kind: input, shape index: {}]
  %s8 = inlined_call_operand.vmem [shape: f32[256,1], index: 8, kind: input, shape index: {}]
  %s9 = inlined_call_operand.hbm [shape: bf16[256,128], index: 9, kind: output, shape index: {}]
  %s10 = sld [smem:[#allocation0]]
  $region85: #{tpu_custom_call.1} parent=0
    _
  %s12 = ssub.s32 1, %s10
  %s13 = scalar_select 0, %s12, %s10
  %s14 = sshll.u32 %s0, 4
  %s15 = int_to_ptr.vmem [resolvable:$true] %s14
  %17 = dma.vmem_to_smem %s15, 16, [#allocation5], [#allocation4]
  %s18 = sshll.u32 %s1, 4
  %s19 = int_to_ptr.vmem [resolvable:$true] %s18
  %21 = dma.vmem_to_smem %s19, 16, [#allocation6], [#allocation4]
  %22 = dma.done [#allocation4], 32
  %23 = sfence
  $region1: #{tpu_custom_call.1} parent=0
    #allocation7 [shape = 'u8[65536]{0}', space=vmem, size = 0x10000, scoped, tag = 'input window, operand 4']
    #allocation8 [shape = 's32[2]{0}', space=sflag, size = 0x8, scoped, tag = 'scoped memory for tpu_custom_call.1']
    #allocation9 [shape = 's32[2]{0}', space=sflag, size = 0x8, scoped, tag = 'scoped memory for tpu_custom_call.1']
    #allocation10 [shape = 'u8[32768]{0}', space=vmem, size = 0x8000, scoped, tag = 'input window, operand 5, single buffered']
    #allocation11 [shape = 's32[1]{0}', space=sflag, size = 0x4, scoped, tag = 'scoped memory for tpu_custom_call.1']
    #allocation12 [shape = 'u8[32768]{0}', space=vmem, size = 0x8000, scoped, tag = 'input window, operand 6, single buffered']
    #allocation13 [shape = 'u8[65536]{0}', space=vmem, size = 0x10000, scoped, tag = 'output window, operand 0']
    %24 = vsyncpa [#allocation8], 0
    %s25 = scalar_lea.sflag [#allocation8], 1
    %26 = vsyncpa %s25, 0
    %27 = vsyncpa [#allocation11], 0
    %28 = vsyncpa [#allocation9], 0
    %s29 = scalar_lea.sflag [#allocation9], 1
    %30 = vsyncpa %s29, 0
    loop: start=0, step=1, limit=4
    $region2: #{tpu_custom_call.1} parent=1 // loop_pre_header
      _
    $region3: #{tpu_custom_call.1} parent=1 // loop_header
      %s32 = sphi 0, %s36
      %p33 = scmp.ge.s32.totalorder %s32, 4
      %s39 = sphi 0, %s51
      %s40 = sphi 0, %s47
      %s41 = sphi 0, %s39
      %s42 = sphi 0, %s40
      %s43 = sphi 0, %s41
      %s44 = sphi 0, %s42
      %s60 = sphi 0, %s62
      %s63 = sphi 0, %s60
      %s64 = sphi 0, %s63
      %s80 = sphi 0, %s64
      %s90 = sphi 0, %s92
      %s93 = sphi 0, %s90
      %s94 = sphi 0, %s93
      %s110 = sphi 0, %s94
      %s116 = sphi 0, %s118
      %s119 = sphi 0, %s116
      %s120 = sphi 0, %s119
      %s136 = sphi 0, %s120
      %s140 = sphi 0, %s140
      %s142 = sphi 0, %s140
      %s143 = sphi 0, %s142
      %s157 = sphi 0, %s143
      %s161 = sphi 0, %s161
      %s163 = sphi 0, %s161
      %s164 = sphi 0, %s163
      %s178 = sphi 0, %s164
      %s182 = sphi 0, %s182
      %s184 = sphi 0, %s182
      %s185 = sphi 0, %s184
      %s199 = sphi 0, %s185
      %s205 = sphi 0, %s207
      %s208 = sphi 0, %s205
      %s209 = sphi 0, %s208
      %s225 = sphi 0, %s209
      %s231 = sphi 0, %s233
      %s234 = sphi 0, %s231
      %s235 = sphi 0, %s234
      %s251 = sphi 0, %s235
    $region4: #{tpu_custom_call.1} parent=1 // loop_header_branch
      %35 = sbr.rel (%p33) target = $region8
    $region5: #{tpu_custom_call.1} parent=1 // loop_body
      %s37 = ssub.s32 %s32, 1
      %s38 = ssub.s32 %s32, 2
      %s45 = sadd.s32 1, %s40
      %p46 = scmp.ge.s32.totalorder %s45, 1
      %s47 = scalar_select %p46, 0, %s45
      %s48 = sadd.s32 1, %s39
      %s49 = scalar_select %p46, %s48, %s39
      %p50 = scmp.ge.s32.totalorder %s49, 2
      %s51 = scalar_select %p50, 0, %s49
      %s52 = sadd.s32 %s39, %s40
      %s53 = sld [smem:[#allocation5 + %s52]]
      %s54 = sadd.s32 %s51, %s47
      %s55 = sld [smem:[#allocation5 + %s54]]
      %s56 = ssub.s32 %s39, %s51
      %s57 = ssub.s32 %s53, %s55
      %s58 = sor.u32 %s56, %s57
      %p59 = scmp.eq.s32.totalorder %s58, 0
      %s61 = sadd.s32 %s60, 1
      %s62 = scalar_select %p59, %s60, %s61
      %p65 = pneg %p59
      %p66 = scmp.eq.s32.totalorder %s32, 1
      %p67 = por %p65, %p66
      %p68 = scmp.ne.s32.totalorder %s60, %s63
      %p69 = scmp.eq.s32.totalorder %s32, 0
      %p70 = por %p68, %p69
      %p71 = scmp.ne.s32.totalorder %s60, %s63
      %p72 = scmp.eq.s32.totalorder %s37, 1
      %p73 = por %p71, %p72
      %p74 = scmp.ne.s32.totalorder %s63, %s64
      %p75 = scmp.eq.s32.totalorder %s37, 0
      %p76 = por %p74, %p75
      %p77 = scmp.ne.s32.totalorder %s63, %s64
      %p78 = scmp.eq.s32.totalorder %s38, 1
      %p79 = por %p77, %p78
      %p81 = scmp.ne.s32.totalorder %s64, %s80
      %p82 = scmp.eq.s32.totalorder %s38, 0
      %p83 = por %p81, %p82
      %s84 = sadd.s32 %s39, %s40
      %s85 = sld [smem:[#allocation5 + %s84]]
      %s86 = sadd.s32 %s51, %s47
      %s87 = sld [smem:[#allocation5 + %s86]]
      %s88 = ssub.s32 %s85, %s87
      %p89 = scmp.eq.s32.totalorder %s88, 0
      %s91 = sadd.s32 %s90, 1
      %s92 = scalar_select %p89, %s90, %s91
      %p95 = pneg %p89
      %p96 = scmp.eq.s32.totalorder %s32, 1
      %p97 = por %p95, %p96
      %p98 = scmp.ne.s32.totalorder %s90, %s93
      %p99 = scmp.eq.s32.totalorder %s32, 0
      %p100 = por %p98, %p99
      %p101 = scmp.ne.s32.totalorder %s90, %s93
      %p102 = scmp.eq.s32.totalorder %s37, 1
      %p103 = por %p101, %p102
      %p104 = scmp.ne.s32.totalorder %s93, %s94
      %p105 = scmp.eq.s32.totalorder %s37, 0
      %p106 = por %p104, %p105
      %p107 = scmp.ne.s32.totalorder %s93, %s94
      %p108 = scmp.eq.s32.totalorder %s38, 1
      %p109 = por %p107, %p108
      %p111 = scmp.ne.s32.totalorder %s94, %s110
      %p112 = scmp.eq.s32.totalorder %s38, 0
      %p113 = por %p111, %p112
      %s114 = ssub.s32 %s39, %s51
      %p115 = scmp.eq.s32.totalorder %s114, 0
      %s117 = sadd.s32 %s116, 1
      %s118 = scalar_select %p115, %s116, %s117
      %p121 = pneg %p115
      %p122 = scmp.eq.s32.totalorder %s32, 1
      %p123 = por %p121, %p122
      %p124 = scmp.ne.s32.totalorder %s116, %s119
      %p125 = scmp.eq.s32.totalorder %s32, 0
      %p126 = por %p124, %p125
      %p127 = scmp.ne.s32.totalorder %s116, %s119
      %p128 = scmp.eq.s32.totalorder %s37, 1
      %p129 = por %p127, %p128
      %p130 = scmp.ne.s32.totalorder %s119, %s120
      %p131 = scmp.eq.s32.totalorder %s37, 0
      %p132 = por %p130, %p131
      %p133 = scmp.ne.s32.totalorder %s119, %s120
      %p134 = scmp.eq.s32.totalorder %s38, 1
      %p135 = por %p133, %p134
      %p137 = scmp.ne.s32.totalorder %s120, %s136
      %p138 = scmp.eq.s32.totalorder %s38, 0
      %p139 = por %p137, %p138
      %s141 = sadd.s32 %s140, 1
      %p144 = scmp.eq.s32.totalorder %s32, 1
      %p145 = scmp.ne.s32.totalorder %s140, %s142
      %p146 = scmp.eq.s32.totalorder %s32, 0
      %p147 = por %p145, %p146
      %p148 = scmp.ne.s32.totalorder %s140, %s142
      %p149 = scmp.eq.s32.totalorder %s37, 1
      %p150 = por %p148, %p149
      %p151 = scmp.ne.s32.totalorder %s142, %s143
      %p152 = scmp.eq.s32.totalorder %s37, 0
      %p153 = por %p151, %p152
      %p154 = scmp.ne.s32.totalorder %s142, %s143
      %p155 = scmp.eq.s32.totalorder %s38, 1
      %p156 = por %p154, %p155
      %p158 = scmp.ne.s32.totalorder %s143, %s157
      %p159 = scmp.eq.s32.totalorder %s38, 0
      %p160 = por %p158, %p159
      %s162 = sadd.s32 %s161, 1
      %p165 = scmp.eq.s32.totalorder %s32, 1
      %p166 = scmp.ne.s32.totalorder %s161, %s163
      %p167 = scmp.eq.s32.totalorder %s32, 0
      %p168 = por %p166, %p167
      %p169 = scmp.ne.s32.totalorder %s161, %s163
      %p170 = scmp.eq.s32.totalorder %s37, 1
      %p171 = por %p169, %p170
      %p172 = scmp.ne.s32.totalorder %s163, %s164
      %p173 = scmp.eq.s32.totalorder %s37, 0
      %p174 = por %p172, %p173
      %p175 = scmp.ne.s32.totalorder %s163, %s164
      %p176 = scmp.eq.s32.totalorder %s38, 1
      %p177 = por %p175, %p176
      %p179 = scmp.ne.s32.totalorder %s164, %s178
      %p180 = scmp.eq.s32.totalorder %s38, 0
      %p181 = por %p179, %p180
      %s183 = sadd.s32 %s182, 1
      %p186 = scmp.eq.s32.totalorder %s32, 1
      %p187 = scmp.ne.s32.totalorder %s182, %s184
      %p188 = scmp.eq.s32.totalorder %s32, 0
      %p189 = por %p187, %p188
      %p190 = scmp.ne.s32.totalorder %s182, %s184
      %p191 = scmp.eq.s32.totalorder %s37, 1
      %p192 = por %p190, %p191
      %p193 = scmp.ne.s32.totalorder %s184, %s185
      %p194 = scmp.eq.s32.totalorder %s37, 0
      %p195 = por %p193, %p194
      %p196 = scmp.ne.s32.totalorder %s184, %s185
      %p197 = scmp.eq.s32.totalorder %s38, 1
      %p198 = por %p196, %p197
      %p200 = scmp.ne.s32.totalorder %s185, %s199
      %p201 = scmp.eq.s32.totalorder %s38, 0
      %p202 = por %p200, %p201
      %s203 = ssub.s32 %s39, %s51
      %p204 = scmp.eq.s32.totalorder %s203, 0
      %s206 = sadd.s32 %s205, 1
      %s207 = scalar_select %p204, %s205, %s206
      %p210 = pneg %p204
      %p211 = scmp.eq.s32.totalorder %s32, 1
      %p212 = por %p210, %p211
      %p213 = scmp.ne.s32.totalorder %s205, %s208
      %p214 = scmp.eq.s32.totalorder %s32, 0
      %p215 = por %p213, %p214
      %p216 = scmp.ne.s32.totalorder %s205, %s208
      %p217 = scmp.eq.s32.totalorder %s37, 1
      %p218 = por %p216, %p217
      %p219 = scmp.ne.s32.totalorder %s208, %s209
      %p220 = scmp.eq.s32.totalorder %s37, 0
      %p221 = por %p219, %p220
      %p222 = scmp.ne.s32.totalorder %s208, %s209
      %p223 = scmp.eq.s32.totalorder %s38, 1
      %p224 = por %p222, %p223
      %p226 = scmp.ne.s32.totalorder %s209, %s225
      %p227 = scmp.eq.s32.totalorder %s38, 0
      %p228 = por %p226, %p227
      %s229 = ssub.s32 %s39, %s51
      %p230 = scmp.eq.s32.totalorder %s229, 0
      %s232 = sadd.s32 %s231, 1
      %s233 = scalar_select %p230, %s231, %s232
      %p236 = pneg %p230
      %p237 = scmp.eq.s32.totalorder %s32, 1
      %p238 = por %p236, %p237
      %p239 = scmp.ne.s32.totalorder %s231, %s234
      %p240 = scmp.eq.s32.totalorder %s32, 0
      %p241 = por %p239, %p240
      %p242 = scmp.ne.s32.totalorder %s231, %s234
      %p243 = scmp.eq.s32.totalorder %s37, 1
      %p244 = por %p242, %p243
      %p245 = scmp.ne.s32.totalorder %s234, %s235
      %p246 = scmp.eq.s32.totalorder %s37, 0
      %p247 = por %p245, %p246
      %p248 = scmp.ne.s32.totalorder %s234, %s235
      %p249 = scmp.eq.s32.totalorder %s38, 1
      %p250 = por %p248, %p249
      %p252 = scmp.ne.s32.totalorder %s235, %s251
      %p253 = scmp.eq.s32.totalorder %s38, 0
      %p254 = por %p252, %p253
      %p255 = scmp.le.s32.totalorder 1, %s32
      %p256 = scmp.lt.s32.totalorder %s32, 3
      %p257 = pnand %p255, %p256
      %p258 = pneg %p257
      // Predicated region
      $region9: #{tpu_custom_call.1} parent=5 // pred_check
        _
      $region10: #{tpu_custom_call.1} parent=5 // pred_check_branch
        %260 = sbr.rel (%p257) target = $region12
      $region11: #{tpu_custom_call.1} parent=5 // pred_region
        %s261 = ssub.s32 %s32, 1
        // Predicated region
        $region13: #{tpu_custom_call.1} parent=11 // pred_check
          %p262 = pneg %p153
        $region14: #{tpu_custom_call.1} parent=11 // pred_check_branch
          %264 = sbr.rel (%p262) target = $region16
        $region15: #{tpu_custom_call.1} parent=11 // pred_region
          %s266 = ssub.s32 1024, 1024
          %267 = vsyncadd [#allocation11], %s266
          %s268 = sshll.u32 [#allocation10], 4
          %s269 = int_to_ptr.vmem [resolvable:$true] %s268
          %274 = dma.hbm_to_vmem [thread:$0]  %s5, 1024, %s269, [#allocation11], 64, 64, 4
        $region16: #{tpu_custom_call.1} parent=11 // pred_fallthru
          _
        // Predicated region
        $region17: #{tpu_custom_call.1} parent=11 // pred_check
          %p275 = pneg %p174
        $region18: #{tpu_custom_call.1} parent=11 // pred_check_branch
          %277 = sbr.rel (%p275) target = $region20
        $region19: #{tpu_custom_call.1} parent=11 // pred_region
          %s279 = ssub.s32 1024, 1024
          %280 = vsyncadd [#allocation11], %s279
          %s281 = sshll.u32 [#allocation12], 4
          %s282 = int_to_ptr.vmem [resolvable:$true] %s281
          %287 = dma.hbm_to_vmem [thread:$0]  %s6, 1024, %s282, [#allocation11], 64, 64, 4
        $region20: #{tpu_custom_call.1} parent=11 // pred_fallthru
          _
        // Predicated region
        $region21: #{tpu_custom_call.1} parent=11 // pred_check
          %p288 = pneg %p195
        $region22: #{tpu_custom_call.1} parent=11 // pred_check_branch
          %290 = sbr.rel (%p288) target = $region24
        $region23: #{tpu_custom_call.1} parent=11 // pred_region
          _
        $region24: #{tpu_custom_call.1} parent=11 // pred_fallthru
          _
      $region12: #{tpu_custom_call.1} parent=5 // pred_fallthru
        _
      %p291 = scmp.lt.s32.totalorder %s32, 2
      // Predicated region
      $region25: #{tpu_custom_call.1} parent=5 // pred_check
        %p292 = pneg %p291
      $region26: #{tpu_custom_call.1} parent=5 // pred_check_branch
        %294 = sbr.rel (%p292) target = $region28
      $region27: #{tpu_custom_call.1} parent=5 // pred_region
        // Predicated region
        $region29: #{tpu_custom_call.1} parent=27 // pred_check
          %p295 = pneg %p70
        $region30: #{tpu_custom_call.1} parent=27 // pred_check_branch
          %297 = sbr.rel (%p295) target = $region32
        $region31: #{tpu_custom_call.1} parent=27 // pred_region
          %s298 = sadd.s32 %s39, %s40
          %s299 = sld [smem:[#allocation5 + %s298]]
          %s300 = smul.u32 4, %s39
          %s301 = smul.u32 2, %s299
          %p302 = scmp.lt.s32.totalorder %s300, 7
          %s303 = scalar_select %p302, %s300, 7
          %p304 = scmp.lt.s32.totalorder %s301, 1
          %s305 = scalar_select %p304, %s301, 1
          %s306 = smul.addr %s303, 2
          %s307 = sadd.s32 %s305, %s306
          %s308 = smul.addr %s307, 8
          %s309 = scalar_lea.vmem %s2, %s308
          %s310 = sadd.s32 %s39, %s40
          %s311 = sld [smem:[#allocation5 + %s310]]
          %s312 = smul.u32 4, %s39
          %s313 = smul.u32 2, %s311
        $region32: #{tpu_custom_call.1} parent=27 // pred_fallthru
          _
        // Predicated region
        $region33: #{tpu_custom_call.1} parent=27 // pred_check
          %p314 = pneg %p100
        $region34: #{tpu_custom_call.1} parent=27 // pred_check_branch
          %316 = sbr.rel (%p314) target = $region36
        $region35: #{tpu_custom_call.1} parent=27 // pred_region
          %s317 = sadd.s32 %s39, %s40
          %s318 = sld [smem:[#allocation5 + %s317]]
          %s319 = smul.u32 32, %s318
          %p320 = scmp.lt.s32.totalorder %s319, 31
          %s321 = scalar_select %p320, %s319, 31
          %s322 = smul.addr %s321, 4
          %s323 = scalar_lea.vmem %s3, %s322
          %s324 = sadd.s32 %s39, %s40
          %s325 = sld [smem:[#allocation5 + %s324]]
          %s326 = smul.u32 32, %s325
        $region36: #{tpu_custom_call.1} parent=27 // pred_fallthru
          _
        // Predicated region
        $region37: #{tpu_custom_call.1} parent=27 // pred_check
          %p327 = pneg %p126
        $region38: #{tpu_custom_call.1} parent=27 // pred_check_branch
          %329 = sbr.rel (%p327) target = $region40
        $region39: #{tpu_custom_call.1} parent=27 // pred_region
          %s330 = sand.u32 %s116, 1
          %s331 = scalar_lea.sflag [#allocation8], %s330
          %s332 = sand.u32 %s116, 1
          %s333 = smul.addr %s332, 64
          %s334 = scalar_lea.vmem [#allocation7], %s333
          %s335 = smul.u32 16, %s39
          %s337 = ssub.s32 1024, 1024
          %338 = vsyncadd %s331, %s337
          %s339 = smul.addr %s335, 64
          %s340 = scalar_lea.hbm %s4, %s339
          %s341 = sshll.u32 %s334, 4
          %s342 = int_to_ptr.vmem [resolvable:$true] %s341
          %347 = dma.hbm_to_vmem [thread:$0]  %s340, 1024, %s342, %s331, 64, 64, 4
        $region40: #{tpu_custom_call.1} parent=27 // pred_fallthru
          _
        // Predicated region
        $region41: #{tpu_custom_call.1} parent=27 // pred_check
          %p348 = pneg %p215
        $region42: #{tpu_custom_call.1} parent=27 // pred_check_branch
          %350 = sbr.rel (%p348) target = $region44
        $region43: #{tpu_custom_call.1} parent=27 // pred_region
          %s351 = smul.u32 16, %s39
          %p352 = scmp.lt.s32.totalorder %s351, 31
          %s353 = scalar_select %p352, %s351, 31
          %s354 = smul.addr %s353, 8
          %s355 = scalar_lea.vmem %s8, %s354
          %s356 = smul.u32 16, %s39
        $region44: #{tpu_custom_call.1} parent=27 // pred_fallthru
          _
      $region28: #{tpu_custom_call.1} parent=5 // pred_fallthru
        _
      %p357 = scmp.le.s32.totalorder 1, %s32
      %p358 = scmp.lt.s32.totalorder %s32, 3
      %p359 = pnand %p357, %p358
      %p360 = pneg %p359
      // Predicated region
      $region45: #{tpu_custom_call.1} parent=5 // pred_check
        _
      $region46: #{tpu_custom_call.1} parent=5 // pred_check_branch
        %362 = sbr.rel (%p359) target = $region48
      $region47: #{tpu_custom_call.1} parent=5 // pred_region
        %s363 = ssub.s32 %s32, 1
        %s364 = sand.u32 %s119, 1
        %s365 = scalar_lea.sflag [#allocation8], %s364
        %s366 = sand.u32 %s119, 1
        %s367 = smul.addr %s366, 64
        %s368 = scalar_lea.vmem [#allocation7], %s367
        // Predicated region
        $region49: #{tpu_custom_call.1} parent=47 // pred_check
          %p369 = pneg %p132
        $region50: #{tpu_custom_call.1} parent=47 // pred_check_branch
          %371 = sbr.rel (%p369) target = $region52
        $region51: #{tpu_custom_call.1} parent=47 // pred_region
          %372 = dma.done %s365, 1024
        $region52: #{tpu_custom_call.1} parent=47 // pred_fallthru
          _
        // Predicated region
        $region53: #{tpu_custom_call.1} parent=47 // pred_check
          %p373 = pneg %p153
        $region54: #{tpu_custom_call.1} parent=47 // pred_check_branch
          %375 = sbr.rel (%p373) target = $region56
        $region55: #{tpu_custom_call.1} parent=47 // pred_region
          %376 = dma.done [#allocation11], 1024
        $region56: #{tpu_custom_call.1} parent=47 // pred_fallthru
          _
        // Predicated region
        $region57: #{tpu_custom_call.1} parent=47 // pred_check
          %p377 = pneg %p174
        $region58: #{tpu_custom_call.1} parent=47 // pred_check_branch
          %379 = sbr.rel (%p377) target = $region60
        $region59: #{tpu_custom_call.1} parent=47 // pred_region
          %380 = dma.done [#allocation11], 1024
        $region60: #{tpu_custom_call.1} parent=47 // pred_fallthru
          _
        %s381 = sadd.s32 %s41, %s42
        %s382 = sld [smem:[#allocation5 + %s381]]
        %s383 = smul.u32 4, %s41
        %s384 = smul.u32 2, %s382
        %p385 = scmp.lt.s32.totalorder %s383, 7
        %s386 = scalar_select %p385, %s383, 7
        %p387 = scmp.lt.s32.totalorder %s384, 1
        %s388 = scalar_select %p387, %s384, 1
        %s389 = smul.addr %s386, 2
        %s390 = sadd.s32 %s388, %s389
        %s391 = smul.addr %s390, 8
        %s392 = scalar_lea.vmem %s2, %s391
        %p393 = pneg %p76
        %p394 = pneg %p73
        %s395 = sadd.s32 %s41, %s42
        %s396 = sld [smem:[#allocation5 + %s395]]
        %s397 = smul.u32 32, %s396
        %p398 = scmp.lt.s32.totalorder %s397, 31
        %s399 = scalar_select %p398, %s397, 31
        %s400 = smul.addr %s399, 4
        %s401 = scalar_lea.vmem %s3, %s400
        %p402 = pneg %p106
        %p403 = pneg %p103
        %s404 = sand.u32 %s119, 1
        %s405 = scalar_lea.sflag [#allocation8], %s404
        %s406 = sand.u32 %s119, 1
        %s407 = smul.addr %s406, 64
        %s408 = scalar_lea.vmem [#allocation7], %s407
        %p409 = pneg %p132
        %p410 = pneg %p129
        %p411 = pneg %p153
        %p412 = pneg %p150
        %p413 = pneg %p174
        %p414 = pneg %p171
        %p415 = pneg %p195
        %p416 = pneg %p192
        %s417 = smul.u32 16, %s41
        %p418 = scmp.lt.s32.totalorder %s417, 31
        %s419 = scalar_select %p418, %s417, 31
        %s420 = smul.addr %s419, 8
        %s421 = scalar_lea.vmem %s8, %s420
        %p422 = pneg %p221
        %p423 = pneg %p218
        %p424 = pneg %p247
        %p425 = pneg %p244
        %s426 = sand.u32 %s234, 1
        %s427 = scalar_lea.sflag [#allocation9], %s426
        %s428 = sand.u32 %s234, 1
        %s429 = smul.addr %s428, 64
        %s430 = scalar_lea.vmem [#allocation13], %s429
        %s431 = sadd.s32 %s41, %s42
        %s432 = sld [smem:[#allocation5 + %s431]]
        %s433 = smul.u32 4, %s41
        %s434 = smul.u32 2, %s432
        %p435 = scmp.lt.s32.totalorder %s433, 7
        %s436 = scalar_select %p435, %s433, 7
        %p437 = scmp.lt.s32.totalorder %s434, 1
        %s438 = scalar_select %p437, %s434, 1
        %s439 = smul.addr %s436, 2
        %s440 = sadd.s32 %s438, %s439
        %s441 = smul.addr %s440, 8
        %s442 = scalar_lea.vmem %s2, %s441
        %s443 = sadd.s32 %s41, %s42
        %s444 = sld [smem:[#allocation5 + %s443]]
        %s445 = smul.u32 4, %s41
        %s446 = smul.u32 2, %s444
        %s447 = sadd.s32 %s41, %s42
        %s448 = sld [smem:[#allocation5 + %s447]]
        %s449 = smul.u32 32, %s448
        %p450 = scmp.lt.s32.totalorder %s449, 31
        %s451 = scalar_select %p450, %s449, 31
        %s452 = smul.addr %s451, 4
        %s453 = scalar_lea.vmem %s3, %s452
        %s454 = sadd.s32 %s41, %s42
        %s455 = sld [smem:[#allocation5 + %s454]]
        %s456 = smul.u32 32, %s455
        %s457 = smul.u32 16, %s41
        %s458 = smul.u32 16, %s41
        %p459 = scmp.lt.s32.totalorder %s458, 31
        %s460 = scalar_select %p459, %s458, 31
        %s461 = smul.addr %s460, 8
        %s462 = scalar_lea.vmem %s8, %s461
        %s463 = smul.u32 16, %s41
        %s464 = smul.u32 16, %s41
        %p466 = scmp.eq.s32.totalorder %s42, 0
        // Predicated region
        $region61: #{tpu_custom_call.1} parent=47 // pred_check
          %p467 = pneg %p466
        $region62: #{tpu_custom_call.1} parent=47 // pred_check_branch
          %469 = sbr.rel (%p467) target = $region64
        $region63: #{tpu_custom_call.1} parent=47 // pred_region
          %470 = vst [vmem:[#allocation2] sm:$0xff] 0.0
          %471 = vst [vmem:[#allocation2 + $0x8] sm:$0xff] 0.0
          %472 = vst [vmem:[#allocation2 + $0x10] sm:$0xff] 0.0
          %473 = vst [vmem:[#allocation2 + $0x18] sm:$0xff] 0.0
          %474 = vst [vmem:[#allocation2 + $0x20] sm:$0xff] 0.0
          %475 = vst [vmem:[#allocation2 + $0x28] sm:$0xff] 0.0
          %476 = vst [vmem:[#allocation2 + $0x30] sm:$0xff] 0.0
          %477 = vst [vmem:[#allocation2 + $0x38] sm:$0xff] 0.0
          %478 = vst [vmem:[#allocation2 + $0x40] sm:$0xff] 0.0
          %479 = vst [vmem:[#allocation2 + $0x48] sm:$0xff] 0.0
          %480 = vst [vmem:[#allocation2 + $0x50] sm:$0xff] 0.0
          %481 = vst [vmem:[#allocation2 + $0x58] sm:$0xff] 0.0
          %482 = vst [vmem:[#allocation2 + $0x60] sm:$0xff] 0.0
          %483 = vst [vmem:[#allocation2 + $0x68] sm:$0xff] 0.0
          %484 = vst [vmem:[#allocation2 + $0x70] sm:$0xff] 0.0
          %485 = vst [vmem:[#allocation2 + $0x78] sm:$0xff] 0.0
          %v486 = vld [vmem:[%s368] sm:$0xf]
          %v487 = vld [vmem:[%s368 + $0x4] sm:$0xf]
          %v488 = vld [vmem:[%s368 + $0x8] sm:$0xf]
          %v489 = vld [vmem:[%s368 + $0xc] sm:$0xf]
          %v490 = vld [vmem:[%s368 + $0x10] sm:$0xf]
          %v491 = vld [vmem:[%s368 + $0x14] sm:$0xf]
          %v492 = vld [vmem:[%s368 + $0x18] sm:$0xf]
          %v493 = vld [vmem:[%s368 + $0x1c] sm:$0xf]
          %v494 = vld [vmem:[%s368 + $0x20] sm:$0xf]
          %v495 = vld [vmem:[%s368 + $0x24] sm:$0xf]
          %v496 = vld [vmem:[%s368 + $0x28] sm:$0xf]
          %v497 = vld [vmem:[%s368 + $0x2c] sm:$0xf]
          %v498 = vld [vmem:[%s368 + $0x30] sm:$0xf]
          %v499 = vld [vmem:[%s368 + $0x34] sm:$0xf]
          %v500 = vld [vmem:[%s368 + $0x38] sm:$0xf]
          %v501 = vld [vmem:[%s368 + $0x3c] sm:$0xf]
          %v502 = vld [vmem:[#allocation10] sm:$0xf]
          %v503 = vld [vmem:[#allocation10 + $0x4] sm:$0xf]
          %v504 = vld [vmem:[#allocation10 + $0x8] sm:$0xf]
          %v505 = vld [vmem:[#allocation10 + $0xc] sm:$0xf]
          %v506 = vld [vmem:[#allocation10 + $0x10] sm:$0xf]
          %v507 = vld [vmem:[#allocation10 + $0x14] sm:$0xf]
          %v508 = vld [vmem:[#allocation10 + $0x18] sm:$0xf]
          %v509 = vld [vmem:[#allocation10 + $0x1c] sm:$0xf]
          %v510 = vld [vmem:[#allocation10 + $0x20] sm:$0xf]
          %v511 = vld [vmem:[#allocation10 + $0x24] sm:$0xf]
          %v512 = vld [vmem:[#allocation10 + $0x28] sm:$0xf]
          %v513 = vld [vmem:[#allocation10 + $0x2c] sm:$0xf]
          %v514 = vld [vmem:[#allocation10 + $0x30] sm:$0xf]
          %v515 = vld [vmem:[#allocation10 + $0x34] sm:$0xf]
          %v516 = vld [vmem:[#allocation10 + $0x38] sm:$0xf]
          %v517 = vld [vmem:[#allocation10 + $0x3c] sm:$0xf]
          %v534 = vunpack.c.l.b16 %v486
          %v535 = vunpack.c.l.b16 %v487
          %v536 = vunpack.c.l.b16 %v488
          %v537 = vunpack.c.l.b16 %v489
          %v538 = vunpack.c.l.b16 %v490
          %v539 = vunpack.c.l.b16 %v491
          %v540 = vunpack.c.l.b16 %v492
          %v541 = vunpack.c.l.b16 %v493
          %v542 = vunpack.c.l.b16 %v494
          %v543 = vunpack.c.l.b16 %v495
          %v544 = vunpack.c.l.b16 %v496
          %v545 = vunpack.c.l.b16 %v497
          %v546 = vunpack.c.l.b16 %v498
          %v547 = vunpack.c.l.b16 %v499
          %v548 = vunpack.c.l.b16 %v500
          %v549 = vunpack.c.l.b16 %v501
          %v550 = vpack.c.b16 %v535, %v534
          %v551 = vpack.c.b16 %v537, %v536
          %v552 = vpack.c.b16 %v539, %v538
          %v553 = vpack.c.b16 %v541, %v540
          %v554 = vpack.c.b16 %v543, %v542
          %v555 = vpack.c.b16 %v545, %v544
          %v556 = vpack.c.b16 %v547, %v546
          %v557 = vpack.c.b16 %v549, %v548
          %v582 = vunpack.c.l.b16 %v502
          %v583 = vunpack.c.l.b16 %v503
          %v584 = vunpack.c.l.b16 %v504
          %v585 = vunpack.c.l.b16 %v505
          %v586 = vunpack.c.l.b16 %v506
          %v587 = vunpack.c.l.b16 %v507
          %v588 = vunpack.c.l.b16 %v508
          %v589 = vunpack.c.l.b16 %v509
          %v590 = vunpack.c.l.b16 %v510
          %v591 = vunpack.c.l.b16 %v511
          %v592 = vunpack.c.l.b16 %v512
          %v593 = vunpack.c.l.b16 %v513
          %v594 = vunpack.c.l.b16 %v514
          %v595 = vunpack.c.l.b16 %v515
          %v596 = vunpack.c.l.b16 %v516
          %v597 = vunpack.c.l.b16 %v517
          %v598 = vpack.c.b16 %v583, %v582
          %v599 = vpack.c.b16 %v585, %v584
          %v600 = vpack.c.b16 %v587, %v586
          %v601 = vpack.c.b16 %v589, %v588
          %v602 = vpack.c.b16 %v591, %v590
          %v603 = vpack.c.b16 %v593, %v592
          %v604 = vpack.c.b16 %v595, %v594
          %v605 = vpack.c.b16 %v597, %v596
          %614 = vmatprep.subr.bf16.mxu0 0
          %615 = vmatpush1.bf16.msra.mxu0 %v598
          %616 = vmatprep.subr.bf16.mxu0 0
          %617 = vmatpush1.bf16.msra.mxu0 %v599
          %618 = vmatprep.subr.bf16.mxu0 0
          %619 = vmatpush1.bf16.msra.mxu0 %v600
          %620 = vmatprep.subr.bf16.mxu0 0
          %621 = vmatpush1.bf16.msra.mxu0 %v601
          %622 = vmatprep.subr.bf16.mxu0 0
          %623 = vmatpush1.bf16.msra.mxu0 %v602
          %624 = vmatprep.subr.bf16.mxu0 0
          %625 = vmatpush1.bf16.msra.mxu0 %v603
          %626 = vmatprep.subr.bf16.mxu0 0
          %627 = vmatpush1.bf16.msra.mxu0 %v604
          %628 = vmatprep.subr.bf16.mxu0 0
          %629 = vmatpush1.bf16.msra.mxu0 %v605
          %630 = vmatprep.subr.bf16.mxu0 0
          %631 = vmatpush1.bf16.msra.mxu0 0
          %632 = vmatprep.subr.bf16.mxu0 0
          %633 = vmatpush1.bf16.msra.mxu0 0
          %634 = vmatprep.subr.bf16.mxu0 0
          %635 = vmatpush1.bf16.msra.mxu0 0
          %636 = vmatprep.subr.bf16.mxu0 0
          %637 = vmatpush1.bf16.msra.mxu0 0
          %638 = vmatprep.subr.bf16.mxu0 0
          %639 = vmatpush1.bf16.msra.mxu0 0
          %640 = vmatprep.subr.bf16.mxu0 0
          %641 = vmatpush1.bf16.msra.mxu0 0
          %642 = vmatprep.subr.bf16.mxu0 0
          %643 = vmatpush1.bf16.msra.mxu0 0
          %644 = vmatprep.subr.bf16.mxu0 0
          %645 = vmatpush1.bf16.msra.mxu0 0
          %646 = vmatprep.mubr.bf16.mxu0 0
          %647 = vmatmul.mubr.bf16.gmra.mrb[0].mxu0 %v550
          %v648 = vpop.f32.mrb[0].mxu0
          %v649 = vadd.f32 0.0, %v648
          %v650 = vpop.f32.mrb[0].mxu0
          %v651 = vpop.f32.mrb[0].mxu0
          %v652 = vadd.f32 0.0, %v651
          %v653 = vpop.f32.mrb[0].mxu0
          %654 = vmatprep.mubr.bf16.mxu0 0
          %655 = vmatmul.mubr.bf16.gmra.mrb[0].mxu0 %v551
          %v656 = vpop.f32.mrb[0].mxu0
          %v657 = vadd.f32 0.0, %v656
          %v658 = vpop.f32.mrb[0].mxu0
          %v659 = vpop.f32.mrb[0].mxu0
          %v660 = vadd.f32 0.0, %v659
          %v661 = vpop.f32.mrb[0].mxu0
          %662 = vmatprep.mubr.bf16.mxu0 0
          %663 = vmatmul.mubr.bf16.gmra.mrb[0].mxu0 %v552
          %v664 = vpop.f32.mrb[0].mxu0
          %v665 = vadd.f32 0.0, %v664
          %v666 = vpop.f32.mrb[0].mxu0
          %v667 = vpop.f32.mrb[0].mxu0
          %v668 = vadd.f32 0.0, %v667
          %v669 = vpop.f32.mrb[0].mxu0
          %670 = vmatprep.mubr.bf16.mxu0 0
          %671 = vmatmul.mubr.bf16.gmra.mrb[0].mxu0 %v553
          %v672 = vpop.f32.mrb[0].mxu0
          %v673 = vadd.f32 0.0, %v672
          %v674 = vpop.f32.mrb[0].mxu0
          %v675 = vpop.f32.mrb[0].mxu0
          %v676 = vadd.f32 0.0, %v675
          %v677 = vpop.f32.mrb[0].mxu0
          %678 = vmatprep.mubr.bf16.mxu0 0
          %679 = vmatmul.mubr.bf16.gmra.mrb[0].mxu0 %v554
          %v680 = vpop.f32.mrb[0].mxu0
          %v681 = vadd.f32 0.0, %v680
          %v682 = vpop.f32.mrb[0].mxu0
          %v683 = vpop.f32.mrb[0].mxu0
          %v684 = vadd.f32 0.0, %v683
          %v685 = vpop.f32.mrb[0].mxu0
          %686 = vmatprep.mubr.bf16.mxu0 0
          %687 = vmatmul.mubr.bf16.gmra.mrb[0].mxu0 %v555
          %v688 = vpop.f32.mrb[0].mxu0
          %v689 = vadd.f32 0.0, %v688
          %v690 = vpop.f32.mrb[0].mxu0
          %v691 = vpop.f32.mrb[0].mxu0
          %v692 = vadd.f32 0.0, %v691
          %v693 = vpop.f32.mrb[0].mxu0
          %694 = vmatprep.mubr.bf16.mxu0 0
          %695 = vmatmul.mubr.bf16.gmra.mrb[0].mxu0 %v556
          %v696 = vpop.f32.mrb[0].mxu0
          %v697 = vadd.f32 0.0, %v696
          %v698 = vpop.f32.mrb[0].mxu0
          %v699 = vpop.f32.mrb[0].mxu0
          %v700 = vadd.f32 0.0, %v699
          %v701 = vpop.f32.mrb[0].mxu0
          %702 = vmatprep.mubr.bf16.mxu0 0
          %703 = vmatmul.mubr.bf16.gmra.mrb[0].mxu0 %v557
          %v704 = vpop.f32.mrb[0].mxu0
          %v705 = vadd.f32 0.0, %v704
          %v706 = vpop.f32.mrb[0].mxu0
          %v707 = vpop.f32.mrb[0].mxu0
          %v708 = vadd.f32 0.0, %v707
          %v709 = vpop.f32.mrb[0].mxu0
          %710 = vdwg.mxu0
          %711 = vst [vmem:[#allocation3] sm:$0xff] %v649
          %712 = vst [vmem:[#allocation3 + $0x8] sm:$0xff] %v652
          %713 = vst [vmem:[#allocation3 + $0x10] sm:$0xff] %v657
          %714 = vst [vmem:[#allocation3 + $0x18] sm:$0xff] %v660
          %715 = vst [vmem:[#allocation3 + $0x20] sm:$0xff] %v665
          %716 = vst [vmem:[#allocation3 + $0x28] sm:$0xff] %v668
          %717 = vst [vmem:[#allocation3 + $0x30] sm:$0xff] %v673
          %718 = vst [vmem:[#allocation3 + $0x38] sm:$0xff] %v676
          %719 = vst [vmem:[#allocation3 + $0x40] sm:$0xff] %v681
          %720 = vst [vmem:[#allocation3 + $0x48] sm:$0xff] %v684
          %721 = vst [vmem:[#allocation3 + $0x50] sm:$0xff] %v689
          %722 = vst [vmem:[#allocation3 + $0x58] sm:$0xff] %v692
          %723 = vst [vmem:[#allocation3 + $0x60] sm:$0xff] %v697
          %724 = vst [vmem:[#allocation3 + $0x68] sm:$0xff] %v700
          %725 = vst [vmem:[#allocation3 + $0x70] sm:$0xff] %v705
          %726 = vst [vmem:[#allocation3 + $0x78] sm:$0xff] %v708
        $region64: #{tpu_custom_call.1} parent=47 // pred_fallthru
          _
        %s727 = sld [smem:[#allocation6 + %s41]]
        %p728 = scmp.lt.s32.totalorder %s42, %s727
        // Predicated region
        $region65: #{tpu_custom_call.1} parent=47 // pred_check
          %p729 = pneg %p728
        $region66: #{tpu_custom_call.1} parent=47 // pred_check_branch
          %731 = sbr.rel (%p729) target = $region68
        $region67: #{tpu_custom_call.1} parent=47 // pred_region
          %v732 = vld [vmem:[%s442] sm:$0xff]
          %v733 = vld [vmem:[%s442 + $0x8] sm:$0xff]
          %v734 = vld [vmem:[%s442 + $0x10] sm:$0xff]
          %v735 = vld [vmem:[%s442 + $0x18] sm:$0xff]
          %v736 = vld [vmem:[%s442 + $0x20] sm:$0xff]
          %v737 = vld [vmem:[%s442 + $0x28] sm:$0xff]
          %v738 = vld [vmem:[%s442 + $0x30] sm:$0xff]
          %v739 = vld [vmem:[%s442 + $0x38] sm:$0xff]
          %v740 = vunpack.c.l.s8.bf16 %v732
          %v741 = vunpack.c.l.s8.bf16 %v733
          %v742 = vunpack.c.h.s8.bf16 %v732
          %v743 = vunpack.c.h.s8.bf16 %v733
          %v744 = vunpack.c.l.s8.bf16 %v734
          %v745 = vunpack.c.l.s8.bf16 %v735
          %v746 = vunpack.c.h.s8.bf16 %v734
          %v747 = vunpack.c.h.s8.bf16 %v735
          %v748 = vunpack.c.l.s8.bf16 %v736
          %v749 = vunpack.c.l.s8.bf16 %v737
          %v750 = vunpack.c.h.s8.bf16 %v736
          %v751 = vunpack.c.h.s8.bf16 %v737
          %v752 = vunpack.c.l.s8.bf16 %v738
          %v753 = vunpack.c.l.s8.bf16 %v739
          %v754 = vunpack.c.h.s8.bf16 %v738
          %v755 = vunpack.c.h.s8.bf16 %v739
          %v756 = vld [vmem:[#allocation2] sm:$0xff]
          %v757 = vld [vmem:[#allocation2 + $0x8] sm:$0xff]
          %v758 = vld [vmem:[#allocation2 + $0x10] sm:$0xff]
          %v759 = vld [vmem:[#allocation2 + $0x18] sm:$0xff]
          %v760 = vld [vmem:[#allocation2 + $0x20] sm:$0xff]
          %v761 = vld [vmem:[#allocation2 + $0x28] sm:$0xff]
          %v762 = vld [vmem:[#allocation2 + $0x30] sm:$0xff]
          %v763 = vld [vmem:[#allocation2 + $0x38] sm:$0xff]
          %v764 = vld [vmem:[#allocation2 + $0x40] sm:$0xff]
          %v765 = vld [vmem:[#allocation2 + $0x48] sm:$0xff]
          %v766 = vld [vmem:[#allocation2 + $0x50] sm:$0xff]
          %v767 = vld [vmem:[#allocation2 + $0x58] sm:$0xff]
          %v768 = vld [vmem:[#allocation2 + $0x60] sm:$0xff]
          %v769 = vld [vmem:[#allocation2 + $0x68] sm:$0xff]
          %v770 = vld [vmem:[#allocation2 + $0x70] sm:$0xff]
          %v771 = vld [vmem:[#allocation2 + $0x78] sm:$0xff]
          %v772 = vld [vmem:[%s453] sm:$0xf]
          %v773 = vld [vmem:[%s453 + $0x4] sm:$0xf]
          %v774 = vld [vmem:[%s453 + $0x8] sm:$0xf]
          %v775 = vld [vmem:[%s453 + $0xc] sm:$0xf]
          %v776 = vld [vmem:[%s453 + $0x10] sm:$0xf]
          %v777 = vld [vmem:[%s453 + $0x14] sm:$0xf]
          %v778 = vld [vmem:[%s453 + $0x18] sm:$0xf]
          %v779 = vld [vmem:[%s453 + $0x1c] sm:$0xf]
          %v780 = vld [vmem:[%s453 + $0x20] sm:$0xf]
          %v781 = vld [vmem:[%s453 + $0x24] sm:$0xf]
          %v782 = vld [vmem:[%s453 + $0x28] sm:$0xf]
          %v783 = vld [vmem:[%s453 + $0x2c] sm:$0xf]
          %v784 = vld [vmem:[%s453 + $0x30] sm:$0xf]
          %v785 = vld [vmem:[%s453 + $0x34] sm:$0xf]
          %v786 = vld [vmem:[%s453 + $0x38] sm:$0xf]
          %v787 = vld [vmem:[%s453 + $0x3c] sm:$0xf]
          %v788 = vld [vmem:[%s453 + $0x40] sm:$0xf]
          %v789 = vld [vmem:[%s453 + $0x44] sm:$0xf]
          %v790 = vld [vmem:[%s453 + $0x48] sm:$0xf]
          %v791 = vld [vmem:[%s453 + $0x4c] sm:$0xf]
          %v792 = vld [vmem:[%s453 + $0x50] sm:$0xf]
          %v793 = vld [vmem:[%s453 + $0x54] sm:$0xf]
          %v794 = vld [vmem:[%s453 + $0x58] sm:$0xf]
          %v795 = vld [vmem:[%s453 + $0x5c] sm:$0xf]
          %v796 = vld [vmem:[%s453 + $0x60] sm:$0xf]
          %v797 = vld [vmem:[%s453 + $0x64] sm:$0xf]
          %v798 = vld [vmem:[%s453 + $0x68] sm:$0xf]
          %v799 = vld [vmem:[%s453 + $0x6c] sm:$0xf]
          %v800 = vld [vmem:[%s453 + $0x70] sm:$0xf]
          %v801 = vld [vmem:[%s453 + $0x74] sm:$0xf]
          %v802 = vld [vmem:[%s453 + $0x78] sm:$0xf]
          %v803 = vld [vmem:[%s453 + $0x7c] sm:$0xf]
          %v836 = vunpack.c.l.b16 %v772
          %v837 = vunpack.c.l.b16 %v773
          %v838 = vunpack.c.l.b16 %v774
          %v839 = vunpack.c.l.b16 %v775
          %v840 = vunpack.c.l.b16 %v776
          %v841 = vunpack.c.l.b16 %v777
          %v842 = vunpack.c.l.b16 %v778
          %v843 = vunpack.c.l.b16 %v779
          %v844 = vunpack.c.l.b16 %v780
          %v845 = vunpack.c.l.b16 %v781
          %v846 = vunpack.c.l.b16 %v782
          %v847 = vunpack.c.l.b16 %v783
          %v848 = vunpack.c.l.b16 %v784
          %v849 = vunpack.c.l.b16 %v785
          %v850 = vunpack.c.l.b16 %v786
          %v851 = vunpack.c.l.b16 %v787
          %v852 = vunpack.c.l.b16 %v788
          %v853 = vunpack.c.l.b16 %v789
          %v854 = vunpack.c.l.b16 %v790
          %v855 = vunpack.c.l.b16 %v791
          %v856 = vunpack.c.l.b16 %v792
          %v857 = vunpack.c.l.b16 %v793
          %v858 = vunpack.c.l.b16 %v794
          %v859 = vunpack.c.l.b16 %v795
          %v860 = vunpack.c.l.b16 %v796
          %v861 = vunpack.c.l.b16 %v797
          %v862 = vunpack.c.l.b16 %v798
          %v863 = vunpack.c.l.b16 %v799
          %v864 = vunpack.c.l.b16 %v800
          %v865 = vunpack.c.l.b16 %v801
          %v866 = vunpack.c.l.b16 %v802
          %v867 = vunpack.c.l.b16 %v803
          %v868 = vpack.c.b16 %v837, %v836
          %v869 = vpack.c.b16 %v839, %v838
          %v870 = vpack.c.b16 %v841, %v840
          %v871 = vpack.c.b16 %v843, %v842
          %v872 = vpack.c.b16 %v845, %v844
          %v873 = vpack.c.b16 %v847, %v846
          %v874 = vpack.c.b16 %v849, %v848
          %v875 = vpack.c.b16 %v851, %v850
          %v876 = vpack.c.b16 %v853, %v852
          %v877 = vpack.c.b16 %v855, %v854
          %v878 = vpack.c.b16 %v857, %v856
          %v879 = vpack.c.b16 %v859, %v858
          %v880 = vpack.c.b16 %v861, %v860
          %v881 = vpack.c.b16 %v863, %v862
          %v882 = vpack.c.b16 %v865, %v864
          %v883 = vpack.c.b16 %v867, %v866
          %900 = vmatprep.subr.bf16.mxu0 0
          %901 = vmatpush1.bf16.msra.mxu0 %v868
          %902 = vmatprep.subr.bf16.mxu0 0
          %903 = vmatpush1.bf16.msra.mxu0 %v869
          %904 = vmatprep.subr.bf16.mxu0 0
          %905 = vmatpush1.bf16.msra.mxu0 %v870
          %906 = vmatprep.subr.bf16.mxu0 0
          %907 = vmatpush1.bf16.msra.mxu0 %v871
          %908 = vmatprep.subr.bf16.mxu0 0
          %909 = vmatpush1.bf16.msra.mxu0 %v872
          %910 = vmatprep.subr.bf16.mxu0 0
          %911 = vmatpush1.bf16.msra.mxu0 %v873
          %912 = vmatprep.subr.bf16.mxu0 0
          %913 = vmatpush1.bf16.msra.mxu0 %v874
          %914 = vmatprep.subr.bf16.mxu0 0
          %915 = vmatpush1.bf16.msra.mxu0 %v875
          %916 = vmatprep.subr.bf16.mxu0 0
          %917 = vmatpush1.bf16.msra.mxu0 %v876
          %918 = vmatprep.subr.bf16.mxu0 0
          %919 = vmatpush1.bf16.msra.mxu0 %v877
          %920 = vmatprep.subr.bf16.mxu0 0
          %921 = vmatpush1.bf16.msra.mxu0 %v878
          %922 = vmatprep.subr.bf16.mxu0 0
          %923 = vmatpush1.bf16.msra.mxu0 %v879
          %924 = vmatprep.subr.bf16.mxu0 0
          %925 = vmatpush1.bf16.msra.mxu0 %v880
          %926 = vmatprep.subr.bf16.mxu0 0
          %927 = vmatpush1.bf16.msra.mxu0 %v881
          %928 = vmatprep.subr.bf16.mxu0 0
          %929 = vmatpush1.bf16.msra.mxu0 %v882
          %930 = vmatprep.subr.bf16.mxu0 0
          %931 = vmatpush1.bf16.msra.mxu0 %v883
          %932 = vmatprep.mubr.bf16.mxu0 %v741
          %933 = vmatmul.mubr.bf16.gmra.mrb[0].mxu0 %v740
          %v934 = vpop.f32.mrb[0].mxu0
          %v935 = vadd.f32 0.0, %v934
          %v936 = vpop.f32.mrb[0].mxu0
          %v937 = vpop.f32.mrb[0].mxu0
          %v938 = vadd.f32 0.0, %v937
          %v939 = vpop.f32.mrb[0].mxu0
          %940 = vmatprep.mubr.bf16.mxu0 %v743
          %941 = vmatmul.mubr.bf16.gmra.mrb[0].mxu0 %v742
          %v942 = vpop.f32.mrb[0].mxu0
          %v943 = vadd.f32 0.0, %v942
          %v944 = vpop.f32.mrb[0].mxu0
          %v945 = vpop.f32.mrb[0].mxu0
          %v946 = vadd.f32 0.0, %v945
          %v947 = vpop.f32.mrb[0].mxu0
          %948 = vmatprep.mubr.bf16.mxu0 %v745
          %949 = vmatmul.mubr.bf16.gmra.mrb[0].mxu0 %v744
          %v950 = vpop.f32.mrb[0].mxu0
          %v951 = vadd.f32 0.0, %v950
          %v952 = vpop.f32.mrb[0].mxu0
          %v953 = vpop.f32.mrb[0].mxu0
          %v954 = vadd.f32 0.0, %v953
          %v955 = vpop.f32.mrb[0].mxu0
          %956 = vmatprep.mubr.bf16.mxu0 %v747
          %957 = vmatmul.mubr.bf16.gmra.mrb[0].mxu0 %v746
          %v958 = vpop.f32.mrb[0].mxu0
          %v959 = vadd.f32 0.0, %v958
          %v960 = vpop.f32.mrb[0].mxu0
          %v961 = vpop.f32.mrb[0].mxu0
          %v962 = vadd.f32 0.0, %v961
          %v963 = vpop.f32.mrb[0].mxu0
          %964 = vmatprep.mubr.bf16.mxu0 %v749
          %965 = vmatmul.mubr.bf16.gmra.mrb[0].mxu0 %v748
          %v966 = vpop.f32.mrb[0].mxu0
          %v967 = vadd.f32 0.0, %v966
          %v968 = vpop.f32.mrb[0].mxu0
          %v969 = vpop.f32.mrb[0].mxu0
          %v970 = vadd.f32 0.0, %v969
          %v971 = vpop.f32.mrb[0].mxu0
          %972 = vmatprep.mubr.bf16.mxu0 %v751
          %973 = vmatmul.mubr.bf16.gmra.mrb[0].mxu0 %v750
          %v974 = vpop.f32.mrb[0].mxu0
          %v975 = vadd.f32 0.0, %v974
          %v976 = vpop.f32.mrb[0].mxu0
          %v977 = vpop.f32.mrb[0].mxu0
          %v978 = vadd.f32 0.0, %v977
          %v979 = vpop.f32.mrb[0].mxu0
          %980 = vmatprep.mubr.bf16.mxu0 %v753
          %981 = vmatmul.mubr.bf16.gmra.mrb[0].mxu0 %v752
          %v982 = vpop.f32.mrb[0].mxu0
          %v983 = vadd.f32 0.0, %v982
          %v984 = vpop.f32.mrb[0].mxu0
          %v985 = vpop.f32.mrb[0].mxu0
          %v986 = vadd.f32 0.0, %v985
          %v987 = vpop.f32.mrb[0].mxu0
          %988 = vmatprep.mubr.bf16.mxu0 %v755
          %989 = vmatmul.mubr.bf16.gmra.mrb[0].mxu0 %v754
          %v990 = vpop.f32.mrb[0].mxu0
          %v991 = vadd.f32 0.0, %v990
          %v992 = vpop.f32.mrb[0].mxu0
          %v993 = vpop.f32.mrb[0].mxu0
          %v994 = vadd.f32 0.0, %v993
          %v995 = vpop.f32.mrb[0].mxu0
          %996 = vdwg.mxu0
          %v997 = vadd.f32 %v756, %v935
          %v998 = vadd.f32 %v757, %v938
          %v999 = vadd.f32 %v758, %v943
          %v1000 = vadd.f32 %v759, %v946
          %v1001 = vadd.f32 %v760, %v951
          %v1002 = vadd.f32 %v761, %v954
          %v1003 = vadd.f32 %v762, %v959
          %v1004 = vadd.f32 %v763, %v962
          %v1005 = vadd.f32 %v764, %v967
          %v1006 = vadd.f32 %v765, %v970
          %v1007 = vadd.f32 %v766, %v975
          %v1008 = vadd.f32 %v767, %v978
          %v1009 = vadd.f32 %v768, %v983
          %v1010 = vadd.f32 %v769, %v986
          %v1011 = vadd.f32 %v770, %v991
          %v1012 = vadd.f32 %v771, %v994
          %1013 = vst [vmem:[#allocation2] sm:$0xff] %v997
          %1014 = vst [vmem:[#allocation2 + $0x8] sm:$0xff] %v998
          %1015 = vst [vmem:[#allocation2 + $0x10] sm:$0xff] %v999
          %1016 = vst [vmem:[#allocation2 + $0x18] sm:$0xff] %v1000
          %1017 = vst [vmem:[#allocation2 + $0x20] sm:$0xff] %v1001
          %1018 = vst [vmem:[#allocation2 + $0x28] sm:$0xff] %v1002
          %1019 = vst [vmem:[#allocation2 + $0x30] sm:$0xff] %v1003
          %1020 = vst [vmem:[#allocation2 + $0x38] sm:$0xff] %v1004
          %1021 = vst [vmem:[#allocation2 + $0x40] sm:$0xff] %v1005
          %1022 = vst [vmem:[#allocation2 + $0x48] sm:$0xff] %v1006
          %1023 = vst [vmem:[#allocation2 + $0x50] sm:$0xff] %v1007
          %1024 = vst [vmem:[#allocation2 + $0x58] sm:$0xff] %v1008
          %1025 = vst [vmem:[#allocation2 + $0x60] sm:$0xff] %v1009
          %1026 = vst [vmem:[#allocation2 + $0x68] sm:$0xff] %v1010
          %1027 = vst [vmem:[#allocation2 + $0x70] sm:$0xff] %v1011
          %1028 = vst [vmem:[#allocation2 + $0x78] sm:$0xff] %v1012
        $region68: #{tpu_custom_call.1} parent=47 // pred_fallthru
          _
        // Predicated region
        $region69: #{tpu_custom_call.1} parent=47 // pred_check
          %p1029 = pneg %p466
        $region70: #{tpu_custom_call.1} parent=47 // pred_check_branch
          %1031 = sbr.rel (%p1029) target = $region72
        $region71: #{tpu_custom_call.1} parent=47 // pred_region
          %v1032 = vld [vmem:[#allocation2] sm:$0xff]
          %v1033 = vld [vmem:[#allocation2 + $0x8] sm:$0xff]
          %v1034 = vld [vmem:[#allocation2 + $0x10] sm:$0xff]
          %v1035 = vld [vmem:[#allocation2 + $0x18] sm:$0xff]
          %v1036 = vld [vmem:[#allocation2 + $0x20] sm:$0xff]
          %v1037 = vld [vmem:[#allocation2 + $0x28] sm:$0xff]
          %v1038 = vld [vmem:[#allocation2 + $0x30] sm:$0xff]
          %v1039 = vld [vmem:[#allocation2 + $0x38] sm:$0xff]
          %v1040 = vld [vmem:[#allocation2 + $0x40] sm:$0xff]
          %v1041 = vld [vmem:[#allocation2 + $0x48] sm:$0xff]
          %v1042 = vld [vmem:[#allocation2 + $0x50] sm:$0xff]
          %v1043 = vld [vmem:[#allocation2 + $0x58] sm:$0xff]
          %v1044 = vld [vmem:[#allocation2 + $0x60] sm:$0xff]
          %v1045 = vld [vmem:[#allocation2 + $0x68] sm:$0xff]
          %v1046 = vld [vmem:[#allocation2 + $0x70] sm:$0xff]
          %v1047 = vld [vmem:[#allocation2 + $0x78] sm:$0xff]
          %v1048 = vpack.c.bf16 %v1033, %v1032
          %v1049 = vpack.c.bf16 %v1035, %v1034
          %v1050 = vpack.c.bf16 %v1037, %v1036
          %v1051 = vpack.c.bf16 %v1039, %v1038
          %v1052 = vpack.c.bf16 %v1041, %v1040
          %v1053 = vpack.c.bf16 %v1043, %v1042
          %v1054 = vpack.c.bf16 %v1045, %v1044
          %v1055 = vpack.c.bf16 %v1047, %v1046
          %v1056 = vld [vmem:[#allocation12] sm:$0xf]
          %v1057 = vld [vmem:[#allocation12 + $0x4] sm:$0xf]
          %v1058 = vld [vmem:[#allocation12 + $0x8] sm:$0xf]
          %v1059 = vld [vmem:[#allocation12 + $0xc] sm:$0xf]
          %v1060 = vld [vmem:[#allocation12 + $0x10] sm:$0xf]
          %v1061 = vld [vmem:[#allocation12 + $0x14] sm:$0xf]
          %v1062 = vld [vmem:[#allocation12 + $0x18] sm:$0xf]
          %v1063 = vld [vmem:[#allocation12 + $0x1c] sm:$0xf]
          %v1064 = vld [vmem:[#allocation12 + $0x20] sm:$0xf]
          %v1065 = vld [vmem:[#allocation12 + $0x24] sm:$0xf]
          %v1066 = vld [vmem:[#allocation12 + $0x28] sm:$0xf]
          %v1067 = vld [vmem:[#allocation12 + $0x2c] sm:$0xf]
          %v1068 = vld [vmem:[#allocation12 + $0x30] sm:$0xf]
          %v1069 = vld [vmem:[#allocation12 + $0x34] sm:$0xf]
          %v1070 = vld [vmem:[#allocation12 + $0x38] sm:$0xf]
          %v1071 = vld [vmem:[#allocation12 + $0x3c] sm:$0xf]
          %v1088 = vunpack.c.l.b16 %v1056
          %v1089 = vunpack.c.l.b16 %v1057
          %v1090 = vunpack.c.l.b16 %v1058
          %v1091 = vunpack.c.l.b16 %v1059
          %v1092 = vunpack.c.l.b16 %v1060
          %v1093 = vunpack.c.l.b16 %v1061
          %v1094 = vunpack.c.l.b16 %v1062
          %v1095 = vunpack.c.l.b16 %v1063
          %v1096 = vunpack.c.l.b16 %v1064
          %v1097 = vunpack.c.l.b16 %v1065
          %v1098 = vunpack.c.l.b16 %v1066
          %v1099 = vunpack.c.l.b16 %v1067
          %v1100 = vunpack.c.l.b16 %v1068
          %v1101 = vunpack.c.l.b16 %v1069
          %v1102 = vunpack.c.l.b16 %v1070
          %v1103 = vunpack.c.l.b16 %v1071
          %v1104 = vpack.c.b16 %v1089, %v1088
          %v1105 = vpack.c.b16 %v1091, %v1090
          %v1106 = vpack.c.b16 %v1093, %v1092
          %v1107 = vpack.c.b16 %v1095, %v1094
          %v1108 = vpack.c.b16 %v1097, %v1096
          %v1109 = vpack.c.b16 %v1099, %v1098
          %v1110 = vpack.c.b16 %v1101, %v1100
          %v1111 = vpack.c.b16 %v1103, %v1102
          %1120 = vmatprep.subr.bf16.mxu0 0
          %1121 = vmatpush1.bf16.msra.mxu0 %v1104
          %1122 = vmatprep.subr.bf16.mxu0 0
          %1123 = vmatpush1.bf16.msra.mxu0 %v1105
          %1124 = vmatprep.subr.bf16.mxu0 0
          %1125 = vmatpush1.bf16.msra.mxu0 %v1106
          %1126 = vmatprep.subr.bf16.mxu0 0
          %1127 = vmatpush1.bf16.msra.mxu0 %v1107
          %1128 = vmatprep.subr.bf16.mxu0 0
          %1129 = vmatpush1.bf16.msra.mxu0 %v1108
          %1130 = vmatprep.subr.bf16.mxu0 0
          %1131 = vmatpush1.bf16.msra.mxu0 %v1109
          %1132 = vmatprep.subr.bf16.mxu0 0
          %1133 = vmatpush1.bf16.msra.mxu0 %v1110
          %1134 = vmatprep.subr.bf16.mxu0 0
          %1135 = vmatpush1.bf16.msra.mxu0 %v1111
          %1136 = vmatprep.subr.bf16.mxu0 0
          %1137 = vmatpush1.bf16.msra.mxu0 0
          %1138 = vmatprep.subr.bf16.mxu0 0
          %1139 = vmatpush1.bf16.msra.mxu0 0
          %1140 = vmatprep.subr.bf16.mxu0 0
          %1141 = vmatpush1.bf16.msra.mxu0 0
          %1142 = vmatprep.subr.bf16.mxu0 0
          %1143 = vmatpush1.bf16.msra.mxu0 0
          %1144 = vmatprep.subr.bf16.mxu0 0
          %1145 = vmatpush1.bf16.msra.mxu0 0
          %1146 = vmatprep.subr.bf16.mxu0 0
          %1147 = vmatpush1.bf16.msra.mxu0 0
          %1148 = vmatprep.subr.bf16.mxu0 0
          %1149 = vmatpush1.bf16.msra.mxu0 0
          %1150 = vmatprep.subr.bf16.mxu0 0
          %1151 = vmatpush1.bf16.msra.mxu0 0
          %1152 = vmatprep.mubr.bf16.mxu0 0
          %1153 = vmatmul.mubr.bf16.gmra.mrb[0].mxu0 %v1048
          %v1154 = vpop.f32.mrb[0].mxu0
          %v1155 = vadd.f32 0.0, %v1154
          %v1156 = vpop.f32.mrb[0].mxu0
          %v1157 = vpop.f32.mrb[0].mxu0
          %v1158 = vadd.f32 0.0, %v1157
          %v1159 = vpop.f32.mrb[0].mxu0
          %1160 = vmatprep.mubr.bf16.mxu0 0
          %1161 = vmatmul.mubr.bf16.gmra.mrb[0].mxu0 %v1049
          %v1162 = vpop.f32.mrb[0].mxu0
          %v1163 = vadd.f32 0.0, %v1162
          %v1164 = vpop.f32.mrb[0].mxu0
          %v1165 = vpop.f32.mrb[0].mxu0
          %v1166 = vadd.f32 0.0, %v1165
          %v1167 = vpop.f32.mrb[0].mxu0
          %1168 = vmatprep.mubr.bf16.mxu0 0
          %1169 = vmatmul.mubr.bf16.gmra.mrb[0].mxu0 %v1050
          %v1170 = vpop.f32.mrb[0].mxu0
          %v1171 = vadd.f32 0.0, %v1170
          %v1172 = vpop.f32.mrb[0].mxu0
          %v1173 = vpop.f32.mrb[0].mxu0
          %v1174 = vadd.f32 0.0, %v1173
          %v1175 = vpop.f32.mrb[0].mxu0
          %1176 = vmatprep.mubr.bf16.mxu0 0
          %1177 = vmatmul.mubr.bf16.gmra.mrb[0].mxu0 %v1051
          %v1178 = vpop.f32.mrb[0].mxu0
          %v1179 = vadd.f32 0.0, %v1178
          %v1180 = vpop.f32.mrb[0].mxu0
          %v1181 = vpop.f32.mrb[0].mxu0
          %v1182 = vadd.f32 0.0, %v1181
          %v1183 = vpop.f32.mrb[0].mxu0
          %1184 = vmatprep.mubr.bf16.mxu0 0
          %1185 = vmatmul.mubr.bf16.gmra.mrb[0].mxu0 %v1052
          %v1186 = vpop.f32.mrb[0].mxu0
          %v1187 = vadd.f32 0.0, %v1186
          %v1188 = vpop.f32.mrb[0].mxu0
          %v1189 = vpop.f32.mrb[0].mxu0
          %v1190 = vadd.f32 0.0, %v1189
          %v1191 = vpop.f32.mrb[0].mxu0
          %1192 = vmatprep.mubr.bf16.mxu0 0
          %1193 = vmatmul.mubr.bf16.gmra.mrb[0].mxu0 %v1053
          %v1194 = vpop.f32.mrb[0].mxu0
          %v1195 = vadd.f32 0.0, %v1194
          %v1196 = vpop.f32.mrb[0].mxu0
          %v1197 = vpop.f32.mrb[0].mxu0
          %v1198 = vadd.f32 0.0, %v1197
          %v1199 = vpop.f32.mrb[0].mxu0
          %1200 = vmatprep.mubr.bf16.mxu0 0
          %1201 = vmatmul.mubr.bf16.gmra.mrb[0].mxu0 %v1054
          %v1202 = vpop.f32.mrb[0].mxu0
          %v1203 = vadd.f32 0.0, %v1202
          %v1204 = vpop.f32.mrb[0].mxu0
          %v1205 = vpop.f32.mrb[0].mxu0
          %v1206 = vadd.f32 0.0, %v1205
          %v1207 = vpop.f32.mrb[0].mxu0
          %1208 = vmatprep.mubr.bf16.mxu0 0
          %1209 = vmatmul.mubr.bf16.gmra.mrb[0].mxu0 %v1055
          %v1210 = vpop.f32.mrb[0].mxu0
          %v1211 = vadd.f32 0.0, %v1210
          %v1212 = vpop.f32.mrb[0].mxu0
          %v1213 = vpop.f32.mrb[0].mxu0
          %v1214 = vadd.f32 0.0, %v1213
          %v1215 = vpop.f32.mrb[0].mxu0
          %1216 = vdwg.mxu0
          %v1217 = vld [vmem:[#allocation3] sm:$0xff]
          %v1218 = vld [vmem:[#allocation3 + $0x8] sm:$0xff]
          %v1219 = vld [vmem:[#allocation3 + $0x10] sm:$0xff]
          %v1220 = vld [vmem:[#allocation3 + $0x18] sm:$0xff]
          %v1221 = vld [vmem:[#allocation3 + $0x20] sm:$0xff]
          %v1222 = vld [vmem:[#allocation3 + $0x28] sm:$0xff]
          %v1223 = vld [vmem:[#allocation3 + $0x30] sm:$0xff]
          %v1224 = vld [vmem:[#allocation3 + $0x38] sm:$0xff]
          %v1225 = vld [vmem:[#allocation3 + $0x40] sm:$0xff]
          %v1226 = vld [vmem:[#allocation3 + $0x48] sm:$0xff]
          %v1227 = vld [vmem:[#allocation3 + $0x50] sm:$0xff]
          %v1228 = vld [vmem:[#allocation3 + $0x58] sm:$0xff]
          %v1229 = vld [vmem:[#allocation3 + $0x60] sm:$0xff]
          %v1230 = vld [vmem:[#allocation3 + $0x68] sm:$0xff]
          %v1231 = vld [vmem:[#allocation3 + $0x70] sm:$0xff]
          %v1232 = vld [vmem:[#allocation3 + $0x78] sm:$0xff]
          %v1233 = vld [vmem:[%s462] sm:$0xff]
          %v1234 = vld [vmem:[%s462 + $0x8] sm:$0xff]
          %v1235 = vld [vmem:[%s462 + $0x10] sm:$0xff]
          %v1236 = vld [vmem:[%s462 + $0x18] sm:$0xff]
          %v1237 = vld [vmem:[%s462 + $0x20] sm:$0xff]
          %v1238 = vld [vmem:[%s462 + $0x28] sm:$0xff]
          %v1239 = vld [vmem:[%s462 + $0x30] sm:$0xff]
          %v1240 = vld [vmem:[%s462 + $0x38] sm:$0xff]
          %v1241 = vld [vmem:[%s462 + $0x40] sm:$0xff]
          %v1242 = vld [vmem:[%s462 + $0x48] sm:$0xff]
          %v1243 = vld [vmem:[%s462 + $0x50] sm:$0xff]
          %v1244 = vld [vmem:[%s462 + $0x58] sm:$0xff]
          %v1245 = vld [vmem:[%s462 + $0x60] sm:$0xff]
          %v1246 = vld [vmem:[%s462 + $0x68] sm:$0xff]
          %v1247 = vld [vmem:[%s462 + $0x70] sm:$0xff]
          %v1248 = vld [vmem:[%s462 + $0x78] sm:$0xff]
          %1250 = vset.pattern.permute.xlu0 0
          %1251 = vperm.xlu0 %1250, %v1233
          %v1252 = vpop.permute.xlu0 %1251
          %1255 = vset.pattern.permute.xlu0 0
          %1256 = vperm.xlu0 %1255, %v1234
          %v1257 = vpop.permute.xlu0 %1256
          %1260 = vset.pattern.permute.xlu0 0
          %1261 = vperm.xlu0 %1260, %v1235
          %v1262 = vpop.permute.xlu0 %1261
          %1265 = vset.pattern.permute.xlu0 0
          %1266 = vperm.xlu0 %1265, %v1236
          %v1267 = vpop.permute.xlu0 %1266
          %1270 = vset.pattern.permute.xlu0 0
          %1271 = vperm.xlu0 %1270, %v1237
          %v1272 = vpop.permute.xlu0 %1271
          %1275 = vset.pattern.permute.xlu0 0
          %1276 = vperm.xlu0 %1275, %v1238
          %v1277 = vpop.permute.xlu0 %1276
          %1280 = vset.pattern.permute.xlu0 0
          %1281 = vperm.xlu0 %1280, %v1239
          %v1282 = vpop.permute.xlu0 %1281
          %1285 = vset.pattern.permute.xlu0 0
          %1286 = vperm.xlu0 %1285, %v1240
          %v1287 = vpop.permute.xlu0 %1286
          %1290 = vset.pattern.permute.xlu0 0
          %1291 = vperm.xlu0 %1290, %v1241
          %v1292 = vpop.permute.xlu0 %1291
          %1295 = vset.pattern.permute.xlu0 0
          %1296 = vperm.xlu0 %1295, %v1242
          %v1297 = vpop.permute.xlu0 %1296
          %1300 = vset.pattern.permute.xlu0 0
          %1301 = vperm.xlu0 %1300, %v1243
          %v1302 = vpop.permute.xlu0 %1301
          %1305 = vset.pattern.permute.xlu0 0
          %1306 = vperm.xlu0 %1305, %v1244
          %v1307 = vpop.permute.xlu0 %1306
          %1310 = vset.pattern.permute.xlu0 0
          %1311 = vperm.xlu0 %1310, %v1245
          %v1312 = vpop.permute.xlu0 %1311
          %1315 = vset.pattern.permute.xlu0 0
          %1316 = vperm.xlu0 %1315, %v1246
          %v1317 = vpop.permute.xlu0 %1316
          %1320 = vset.pattern.permute.xlu0 0
          %1321 = vperm.xlu0 %1320, %v1247
          %v1322 = vpop.permute.xlu0 %1321
          %1325 = vset.pattern.permute.xlu0 0
          %1326 = vperm.xlu0 %1325, %v1248
          %v1327 = vpop.permute.xlu0 %1326
          %v1329 = vmul.f32 %v1252, %v1155
          %v1330 = vmul.f32 %v1257, %v1158
          %v1331 = vmul.f32 %v1262, %v1163
          %v1332 = vmul.f32 %v1267, %v1166
          %v1333 = vmul.f32 %v1272, %v1171
          %v1334 = vmul.f32 %v1277, %v1174
          %v1335 = vmul.f32 %v1282, %v1179
          %v1336 = vmul.f32 %v1287, %v1182
          %v1337 = vmul.f32 %v1292, %v1187
          %v1338 = vmul.f32 %v1297, %v1190
          %v1339 = vmul.f32 %v1302, %v1195
          %v1340 = vmul.f32 %v1307, %v1198
          %v1341 = vmul.f32 %v1312, %v1203
          %v1342 = vmul.f32 %v1317, %v1206
          %v1343 = vmul.f32 %v1322, %v1211
          %v1344 = vmul.f32 %v1327, %v1214
          %v1345 = vadd.f32 %v1217, %v1329
          %v1346 = vadd.f32 %v1218, %v1330
          %v1347 = vadd.f32 %v1219, %v1331
          %v1348 = vadd.f32 %v1220, %v1332
          %v1349 = vadd.f32 %v1221, %v1333
          %v1350 = vadd.f32 %v1222, %v1334
          %v1351 = vadd.f32 %v1223, %v1335
          %v1352 = vadd.f32 %v1224, %v1336
          %v1353 = vadd.f32 %v1225, %v1337
          %v1354 = vadd.f32 %v1226, %v1338
          %v1355 = vadd.f32 %v1227, %v1339
          %v1356 = vadd.f32 %v1228, %v1340
          %v1357 = vadd.f32 %v1229, %v1341
          %v1358 = vadd.f32 %v1230, %v1342
          %v1359 = vadd.f32 %v1231, %v1343
          %v1360 = vadd.f32 %v1232, %v1344
          %v1361 = vld [vmem:[%s7] sm:$0x1]
          %v1363 = vlaneseq
          %v1364 = vshrl.u32 %v1363, 7
          %v1365 = vsub.s32 0, %v1364
          %v1366 = vrot.slane %v1361, %v1365
          %v1368 = vadd.f32 %v1345, %v1366
          %v1369 = vadd.f32 %v1346, %v1366
          %v1370 = vadd.f32 %v1347, %v1366
          %v1371 = vadd.f32 %v1348, %v1366
          %v1372 = vadd.f32 %v1349, %v1366
          %v1373 = vadd.f32 %v1350, %v1366
          %v1374 = vadd.f32 %v1351, %v1366
          %v1375 = vadd.f32 %v1352, %v1366
          %v1376 = vadd.f32 %v1353, %v1366
          %v1377 = vadd.f32 %v1354, %v1366
          %v1378 = vadd.f32 %v1355, %v1366
          %v1379 = vadd.f32 %v1356, %v1366
          %v1380 = vadd.f32 %v1357, %v1366
          %v1381 = vadd.f32 %v1358, %v1366
          %v1382 = vadd.f32 %v1359, %v1366
          %v1383 = vadd.f32 %v1360, %v1366
          %v1384 = vmax.f32 %v1368, 0.0
          %v1385 = vmax.f32 %v1369, 0.0
          %v1386 = vmax.f32 %v1370, 0.0
          %v1387 = vmax.f32 %v1371, 0.0
          %v1388 = vmax.f32 %v1372, 0.0
          %v1389 = vmax.f32 %v1373, 0.0
          %v1390 = vmax.f32 %v1374, 0.0
          %v1391 = vmax.f32 %v1375, 0.0
          %v1392 = vmax.f32 %v1376, 0.0
          %v1393 = vmax.f32 %v1377, 0.0
          %v1394 = vmax.f32 %v1378, 0.0
          %v1395 = vmax.f32 %v1379, 0.0
          %v1396 = vmax.f32 %v1380, 0.0
          %v1397 = vmax.f32 %v1381, 0.0
          %v1398 = vmax.f32 %v1382, 0.0
          %v1399 = vmax.f32 %v1383, 0.0
          %v1400 = vpack.c.bf16 %v1385, %v1384
          %v1401 = vpack.c.bf16 %v1387, %v1386
          %v1402 = vpack.c.bf16 %v1389, %v1388
          %v1403 = vpack.c.bf16 %v1391, %v1390
          %v1404 = vpack.c.bf16 %v1393, %v1392
          %v1405 = vpack.c.bf16 %v1395, %v1394
          %v1406 = vpack.c.bf16 %v1397, %v1396
          %v1407 = vpack.c.bf16 %v1399, %v1398
          %v1416 = vunpack.c.l.b16 %v1400
          %v1417 = vunpack.c.h.b16 %v1400
          %v1418 = vunpack.c.l.b16 %v1401
          %v1419 = vunpack.c.h.b16 %v1401
          %v1420 = vunpack.c.l.b16 %v1402
          %v1421 = vunpack.c.h.b16 %v1402
          %v1422 = vunpack.c.l.b16 %v1403
          %v1423 = vunpack.c.h.b16 %v1403
          %v1424 = vunpack.c.l.b16 %v1404
          %v1425 = vunpack.c.h.b16 %v1404
          %v1426 = vunpack.c.l.b16 %v1405
          %v1427 = vunpack.c.h.b16 %v1405
          %v1428 = vunpack.c.l.b16 %v1406
          %v1429 = vunpack.c.h.b16 %v1406
          %v1430 = vunpack.c.l.b16 %v1407
          %v1431 = vunpack.c.h.b16 %v1407
          %v1432 = vpack.c.b16 %v1416, %v1416
          %v1433 = vpack.c.b16 %v1417, %v1417
          %v1434 = vpack.c.b16 %v1418, %v1418
          %v1435 = vpack.c.b16 %v1419, %v1419
          %v1436 = vpack.c.b16 %v1420, %v1420
          %v1437 = vpack.c.b16 %v1421, %v1421
          %v1438 = vpack.c.b16 %v1422, %v1422
          %v1439 = vpack.c.b16 %v1423, %v1423
          %v1440 = vpack.c.b16 %v1424, %v1424
          %v1441 = vpack.c.b16 %v1425, %v1425
          %v1442 = vpack.c.b16 %v1426, %v1426
          %v1443 = vpack.c.b16 %v1427, %v1427
          %v1444 = vpack.c.b16 %v1428, %v1428
          %v1445 = vpack.c.b16 %v1429, %v1429
          %v1446 = vpack.c.b16 %v1430, %v1430
          %v1447 = vpack.c.b16 %v1431, %v1431
          %1464 = vst [vmem:[%s430] sm:$0xf] %v1432
          %1465 = vst [vmem:[%s430 + $0x4] sm:$0xf] %v1433
          %1466 = vst [vmem:[%s430 + $0x8] sm:$0xf] %v1434
          %1467 = vst [vmem:[%s430 + $0xc] sm:$0xf] %v1435
          %1468 = vst [vmem:[%s430 + $0x10] sm:$0xf] %v1436
          %1469 = vst [vmem:[%s430 + $0x14] sm:$0xf] %v1437
          %1470 = vst [vmem:[%s430 + $0x18] sm:$0xf] %v1438
          %1471 = vst [vmem:[%s430 + $0x1c] sm:$0xf] %v1439
          %1472 = vst [vmem:[%s430 + $0x20] sm:$0xf] %v1440
          %1473 = vst [vmem:[%s430 + $0x24] sm:$0xf] %v1441
          %1474 = vst [vmem:[%s430 + $0x28] sm:$0xf] %v1442
          %1475 = vst [vmem:[%s430 + $0x2c] sm:$0xf] %v1443
          %1476 = vst [vmem:[%s430 + $0x30] sm:$0xf] %v1444
          %1477 = vst [vmem:[%s430 + $0x34] sm:$0xf] %v1445
          %1478 = vst [vmem:[%s430 + $0x38] sm:$0xf] %v1446
          %1479 = vst [vmem:[%s430 + $0x3c] sm:$0xf] %v1447
        $region72: #{tpu_custom_call.1} parent=47 // pred_fallthru
          _
        %s1480 = sand.u32 %s234, 1
        %s1481 = scalar_lea.sflag [#allocation9], %s1480
        %s1482 = sand.u32 %s234, 1
        %s1483 = smul.addr %s1482, 64
        %s1484 = scalar_lea.vmem [#allocation13], %s1483
        // Predicated region
        $region73: #{tpu_custom_call.1} parent=47 // pred_check
          %p1485 = pneg %p244
        $region74: #{tpu_custom_call.1} parent=47 // pred_check_branch
          %1487 = sbr.rel (%p1485) target = $region76
        $region75: #{tpu_custom_call.1} parent=47 // pred_region
          %s1488 = smul.u32 16, %s41
          %s1490 = ssub.s32 1024, 1024
          %1491 = vsyncadd %s1481, %s1490
          %s1492 = smul.addr %s1488, 64
          %s1493 = scalar_lea.hbm %s9, %s1492
          %s1494 = sshll.u32 %s1484, 4
          %s1495 = int_to_ptr.vmem [resolvable:$true] %s1494
          %1500 = dma.vmem_to_hbm [thread:$0]  %s1495, 1024, %s1493, %s1481, 64, 64, 4
        $region76: #{tpu_custom_call.1} parent=47 // pred_fallthru
          _
      $region48: #{tpu_custom_call.1} parent=5 // pred_fallthru
        _
      %p1501 = scmp.le.s32.totalorder 2, %s32
      // Predicated region
      $region77: #{tpu_custom_call.1} parent=5 // pred_check
        %p1502 = pneg %p1501
      $region78: #{tpu_custom_call.1} parent=5 // pred_check_branch
        %1504 = sbr.rel (%p1502) target = $region80
      $region79: #{tpu_custom_call.1} parent=5 // pred_region
        %s1505 = ssub.s32 %s32, 2
        // Predicated region
        $region81: #{tpu_custom_call.1} parent=79 // pred_check
          %p1506 = pneg %p250
        $region82: #{tpu_custom_call.1} parent=79 // pred_check_branch
          %1508 = sbr.rel (%p1506) target = $region84
        $region83: #{tpu_custom_call.1} parent=79 // pred_region
          %s1509 = sand.u32 %s235, 1
          %s1510 = scalar_lea.sflag [#allocation9], %s1509
          %s1511 = sand.u32 %s235, 1
          %s1512 = smul.addr %s1511, 64
          %s1513 = scalar_lea.vmem [#allocation13], %s1512
          %1514 = dma.done %s1510, 1024
        $region84: #{tpu_custom_call.1} parent=79 // pred_fallthru
          _
      $region80: #{tpu_custom_call.1} parent=5 // pred_fallthru
        _
    $region6: #{tpu_custom_call.1} parent=1 // loop_footer
      %s36 = sadd.s32 1, %s32
    $region7: #{tpu_custom_call.1} parent=1 // loop_footer_branch
      %31 = sbr.rel target = $region3
    $region8: #{tpu_custom_call.1} parent=1 // loop_exit
      _
    %1515 = vsyncpa [#allocation8], 1
    %s1516 = scalar_lea.sflag [#allocation8], 1
    %1517 = vsyncpa %s1516, 1
    %1518 = vsyncpa [#allocation11], 1
    %1519 = vsyncpa [#allocation9], 1
    %s1520 = scalar_lea.sflag [#allocation9], 1
    %1521 = vsyncpa %s1520, 1

</llo_original>
